<compile_context>
chip_gen: v7x
topology: tpu7x:2x2x1
jax: 0.10.0
libtpu: 0.0.40
codegen_flags: <defaults>
</compile_context>

<pallas_src>
import jax
import jax.numpy as jnp
from jax.experimental import pallas as pl
from jax.experimental.pallas import tpu as pltpu


VMEM_LIMIT = 48 * 1024 * 1024  # safe on v5e/v6e (128 MiB phys) and v7x (64 MiB phys)


def _pick_tile(n, candidates=(1024, 512, 256, 128, 64, 32, 16, 8)):
    """Largest candidate tile that divides n (falls back to full extent)."""
    for c in candidates:
        if n % c == 0:
            return c
    return n


def _row_tile(n):
    """Row tile for the fused GCN kernel. The adj block is (tm, n) bf16 and double
    buffered; keep 2 * tm * n * 2 bytes <= ~8 MiB so resident seq_fts/h also fit."""
    cap = max((8 * 1024 * 1024) // (4 * n), 8)
    for c in (1024, 512, 256, 128, 64, 32, 16, 8):
        if c <= cap and n % c == 0:
            return c
    return n


# --------------------------------------------------------------------------------------
# Kernel 1 (fused): per metapath p
#   seq_fts_p = h @ W_p                  (computed once at row-tile 0, resident in VMEM)
#   embeds_p  = PReLU(adj_p @ seq_fts_p + b_p)        -> bf16 output
#   colsum_p += sum_rows tanh(embeds_p @ Wfc + bfc)   -> f32 (P,1,H) output
# --------------------------------------------------------------------------------------
def gcn_attn_kernel(h_ref, w_ref, adj_ref, b_ref, alpha_ref, wfc_ref, bfc_ref,
                    emb_ref, colsum_ref, s_ref):
    i = pl.program_id(1)  # row-tile index (read at top level only; never inside pl.when)

    @pl.when(i == 0)
    def _():
        # seq_fts_p = h @ W_p, once per metapath, kept resident in VMEM scratch.
        s_ref[...] = jnp.dot(h_ref[...], w_ref[...],
                             preferred_element_type=jnp.float32).astype(s_ref.dtype)
        colsum_ref[...] = jnp.zeros_like(colsum_ref)

    # GCN propagation for this row tile (full contraction over N in one MXU call).
    out = jnp.dot(adj_ref[...], s_ref[...],
                  preferred_element_type=jnp.float32) + b_ref[...]          # f32 epilogue
    emb = jnp.where(out >= 0.0, out, alpha_ref[...] * out)                  # PReLU
    emb_bf = emb.astype(emb_ref.dtype)
    emb_ref[...] = emb_bf

    # Fused semantic-attention column sum: sum_rows tanh(emb @ Wfc + bfc).
    t = jnp.tanh(jnp.dot(emb_bf, wfc_ref[...],
                         preferred_element_type=jnp.float32) + bfc_ref[...])
    colsum_ref[...] += jnp.sum(t, axis=0, keepdims=True)


def gcn_attn_fused(adj, h, w_all, b_all, alpha_all, wfc, bfc, *, tm=None):
    p_cnt, n, _ = adj.shape
    hdim = w_all.shape[-1]
    tm = tm or _row_tile(n)
    return pl.pallas_call(
        gcn_attn_kernel,
        out_shape=(jax.ShapeDtypeStruct((p_cnt, n, hdim), jnp.bfloat16),   # embeds (bf16)
                   jax.ShapeDtypeStruct((p_cnt, 1, hdim), jnp.float32)),   # attn colsum
        grid=(p_cnt, n // tm),
        in_specs=[
            pl.BlockSpec((n, hdim), lambda p, i: (0, 0)),              # h, resident
            pl.BlockSpec((None, hdim, hdim), lambda p, i: (p, 0, 0)),  # W_p (pre-transposed)
            pl.BlockSpec((None, tm, n), lambda p, i: (p, i, 0)),       # adj row tile
            pl.BlockSpec((None, 1, hdim), lambda p, i: (p, 0, 0)),     # GCN bias_p (f32)
            pl.BlockSpec((None, 1, hdim), lambda p, i: (p, 0, 0)),     # PReLU alpha_p (f32)
            pl.BlockSpec((hdim, hdim), lambda p, i: (0, 0)),           # att fc W (pre-T)
            pl.BlockSpec((1, hdim), lambda p, i: (0, 0)),              # att fc bias
        ],
        out_specs=(
            pl.BlockSpec((None, tm, hdim), lambda p, i: (p, i, 0)),    # embeds tile
            pl.BlockSpec((None, 1, hdim), lambda p, i: (p, 0, 0)),     # colsum (resident)
        ),
        scratch_shapes=[pltpu.VMEM((n, hdim), jnp.bfloat16)],          # resident seq_fts_p
        compiler_params=pltpu.CompilerParams(
            dimension_semantics=("parallel", "arbitrary"),
            vmem_limit_bytes=VMEM_LIMIT),
    )(h, w_all, adj, b_all, alpha_all, wfc, bfc)


# --------------------------------------------------------------------------------------
# Kernel 2: z_mp = sum_p beta[p] * embeds[p]   (bf16 in, f32 accumulate/out)
# --------------------------------------------------------------------------------------
def combine_kernel(e_ref, beta_ref, o_ref):
    p_cnt = e_ref.shape[0]
    acc = e_ref[0].astype(jnp.float32) * beta_ref[0]       # (tm,H) * (1,1) broadcast
    for p in range(1, p_cnt):                              # P small & static -> unrolled
        acc = acc + e_ref[p].astype(jnp.float32) * beta_ref[p]
    o_ref[...] = acc


def weighted_combine(embeds, beta, *, tm=None):
    p_cnt, n, hdim = embeds.shape
    tm = tm or _pick_tile(n)
    beta3 = beta.reshape(p_cnt, 1, 1).astype(jnp.float32)
    return pl.pallas_call(
        combine_kernel,
        out_shape=jax.ShapeDtypeStruct((n, hdim), jnp.float32),
        grid=(n // tm,),
        in_specs=[
            pl.BlockSpec((p_cnt, tm, hdim), lambda i: (0, i, 0)),  # embeds row tiles, all P
            pl.BlockSpec((p_cnt, 1, 1), lambda i: (0, 0, 0)),      # beta weights
        ],
        out_specs=pl.BlockSpec((tm, hdim), lambda i: (i, 0)),
        compiler_params=pltpu.CompilerParams(
            dimension_semantics=("parallel",),
            vmem_limit_bytes=VMEM_LIMIT),
    )(embeds, beta3)


# --------------------------------------------------------------------------------------
# Kernel 3: Mp_encoder.fc  (Linear(input_dim, hidden, bias=True), used only when fc=True)
# --------------------------------------------------------------------------------------
def linear_bias_kernel(x_ref, wt_ref, b_ref, o_ref):
    o_ref[...] = (jnp.dot(x_ref[...], wt_ref[...],
                          preferred_element_type=jnp.float32)
                  + b_ref[...]).astype(o_ref.dtype)


def linear_bias(x, wt, b, *, tm=None, out_dtype=jnp.bfloat16):
    n, f_in = x.shape
    hdim = wt.shape[1]
    tm = tm or _pick_tile(n)
    return pl.pallas_call(
        linear_bias_kernel,
        out_shape=jax.ShapeDtypeStruct((n, hdim), out_dtype),
        grid=(n // tm,),
        in_specs=[
            pl.BlockSpec((tm, f_in), lambda i: (i, 0)),
            pl.BlockSpec((f_in, hdim), lambda i: (0, 0)),
            pl.BlockSpec((1, hdim), lambda i: (0, 0)),
        ],
        out_specs=pl.BlockSpec((tm, hdim), lambda i: (i, 0)),
        compiler_params=pltpu.CompilerParams(
            dimension_semantics=("parallel",),
            vmem_limit_bytes=VMEM_LIMIT),
    )(x, wt, b)


# --------------------------------------------------------------------------------------
# Parameter init mirroring the PyTorch module __init__ (weights stored pre-transposed).
# --------------------------------------------------------------------------------------
def init_mp_encoder_params(key, P, input_dim, hidden_dim):
    ks = jax.random.split(key, P + 5)
    # xavier_normal_ gain=1.414: std = gain * sqrt(2 / (fan_in + fan_out))
    xav_hh = 1.414 * (2.0 / (hidden_dim + hidden_dim)) ** 0.5
    xav_att = 1.414 * (2.0 / (1 + hidden_dim)) ** 0.5

    # node-level GCNs: Linear(H, H, bias=False) weight [out, in] -> store [in, out]
    gcn_wt = jnp.stack([
        (xav_hh * jax.random.normal(ks[p], (hidden_dim, hidden_dim), jnp.float32)).T
        for p in range(P)
    ])
    gcn_b = jnp.zeros((P, 1, hidden_dim), jnp.float32)             # bias.data.fill_(0.0)
    gcn_alpha = jnp.full((P, 1, hidden_dim), 0.25, jnp.float32)    # nn.PReLU() default

    # Attention: fc Linear(H, H, bias=True) + att (1, H), both xavier_normal (gain 1.414).
    att_fc_w = xav_hh * jax.random.normal(ks[P], (hidden_dim, hidden_dim), jnp.float32)
    fanb = 1.0 / (hidden_dim ** 0.5)
    att_fc_b = jax.random.uniform(ks[P + 1], (1, hidden_dim), jnp.float32, -fanb, fanb)
    att_vec = xav_att * jax.random.normal(ks[P + 2], (1, hidden_dim), jnp.float32)

    # Mp_encoder.fc : Linear(input_dim, hidden_dim, bias=True), torch default init range
    fb = 1.0 / (input_dim ** 0.5)
    fc_w = jax.random.uniform(ks[P + 3], (hidden_dim, input_dim), jnp.float32, -fb, fb)
    fc_b = jax.random.uniform(ks[P + 4], (1, hidden_dim), jnp.float32, -fb, fb)

    return dict(
        gcn_wt=gcn_wt, gcn_b=gcn_b, gcn_alpha=gcn_alpha,
        att_fc_wt=att_fc_w.T, att_fc_b=att_fc_b, att_vec=att_vec,
        fc_wt=fc_w.T, fc_b=fc_b,
    )


# --------------------------------------------------------------------------------------
# Full Mp_encoder forward (Pallas) + pure-JAX f32 reference.
# --------------------------------------------------------------------------------------
def mp_encoder_forward(h, mps, params, fc=False):
    p_cnt, n, _ = mps.shape

    if fc:
        h = linear_bias(h, params["fc_wt"], params["fc_b"])            # (N, H) bf16

    h_bf = h.astype(jnp.bfloat16)
    adj_bf = mps.astype(jnp.bfloat16)
    w_bf = params["gcn_wt"].astype(jnp.bfloat16)
    wfc_bf = params["att_fc_wt"].astype(jnp.bfloat16)

    # Fused: seq_fts + GCN propagation + PReLU + attention column sums, one pallas_call.
    embeds, colsum = gcn_attn_fused(adj_bf, h_bf, w_bf, params["gcn_b"],
                                    params["gcn_alpha"], wfc_bf, params["att_fc_b"])

    # Semantic attention over P metapaths (tiny P x H work -> JAX glue).
    sp = colsum[:, 0, :] / jnp.float32(n)                 # mean over nodes, (P, H)
    scores = sp @ params["att_vec"].reshape(-1)           # (P,)
    beta = jax.nn.softmax(scores)
    # TODO(synk): attn_drop > 0 (training-mode dropout on att) not implemented; eval path.

    return weighted_combine(embeds, beta)                 # (N, H) f32


def mp_encoder_reference(h, mps, params, fc=False):
    """Pure-JAX f32 reference matching the PyTorch forward."""
    if fc:
        h = h @ params["fc_wt"] + params["fc_b"]
    P = mps.shape[0]
    embeds = []
    for p in range(P):
        s = h @ params["gcn_wt"][p]
        out = mps[p] @ s + params["gcn_b"][p]
        embeds.append(jnp.where(out >= 0.0, out, params["gcn_alpha"][p] * out))
    sps = jnp.stack([jnp.tanh(e @ params["att_fc_wt"] + params["att_fc_b"]).mean(axis=0)
                     for e in embeds])                                   # (P, H)
    beta = jax.nn.softmax(sps @ params["att_vec"].reshape(-1))           # (P,)
    z = embeds[0] * beta[0]
    for p in range(1, P):
        z = z + embeds[p] * beta[p]
    return z


if __name__ == "__main__":
    key = jax.random.PRNGKey(0)

    # Small demo: P=3 metapaths, N=256 nodes, input_dim=64, hidden_dim=128 (lane-dense).
    P, N, INPUT_DIM, HIDDEN_DIM = 3, 256, 64, 128

    key, hkey, akey, pkey = jax.random.split(key, 4)
    h = jax.random.normal(hkey, (N, INPUT_DIM), dtype=jnp.float32)

    # Dense row-normalized "adjacency" per metapath (dense stand-in for torch.spmm).
    adj_raw = jax.random.uniform(akey, (P, N, N), dtype=jnp.float32)
    mps = adj_raw / jnp.sum(adj_raw, axis=-1, keepdims=True)

    params = init_mp_encoder_params(pkey, P, INPUT_DIM, HIDDEN_DIM)

    fwd = jax.jit(mp_encoder_forward, static_argnames=("fc",))
    z_mp = fwd(h, mps, params, fc=True)
    jax.block_until_ready(z_mp)

    assert z_mp.shape == (N, HIDDEN_DIM)
    assert z_mp.dtype == jnp.float32
    assert bool(jnp.all(jnp.isfinite(z_mp)))

    # Correctness vs f32 reference (bf16 matmul inputs -> generous tolerance).
    z_ref = mp_encoder_reference(h, mps, params, fc=True)
    max_err = float(jnp.max(jnp.abs(z_mp - z_ref)))
    assert max_err < 5e-2, f"max abs error {max_err}"

    print("KERNEL_OK")
</pallas_src>

<mosaic_0001>
module attributes {stable_mosaic.version = 11 : i64} {
  func.func @linear_bias_kernel(%arg0: i32, %arg1: memref<256x64xf32, #tpu.memory_space<vmem>>, %arg2: memref<64x128xf32, #tpu.memory_space<vmem>>, %arg3: memref<1x128xf32, #tpu.memory_space<vmem>>, %arg4: memref<256x128xbf16, #tpu.memory_space<vmem>>) attributes {dimension_semantics = [#tpu.dimension_semantics<parallel>], iteration_bounds = array<i64: 1>, scalar_prefetch = 0 : i64, scratch_operands = 0 : i64, tpu.core_type = #tpu.core_type<tc>, window_params = [{transform_indices = @transform_0, window_bounds = array<i64: 256, 64>}, {pipeline_mode = #tpu.pipeline_mode<synchronous>, transform_indices = @transform_1, window_bounds = array<i64: 64, 128>}, {pipeline_mode = #tpu.pipeline_mode<synchronous>, transform_indices = @transform_2, window_bounds = array<i64: 1, 128>}, {transform_indices = @transform_3, window_bounds = array<i64: 256, 128>}]} {
    %c0 = arith.constant 0 : index
    %c0_0 = arith.constant 0 : index
    %0 = vector.load %arg1[%c0, %c0_0] : memref<256x64xf32, #tpu.memory_space<vmem>>, vector<256x64xf32>
    %c0_1 = arith.constant 0 : index
    %c0_2 = arith.constant 0 : index
    %1 = vector.load %arg2[%c0_1, %c0_2] : memref<64x128xf32, #tpu.memory_space<vmem>>, vector<64x128xf32>
    %cst = arith.constant dense<0.000000e+00> : vector<256x128xf32>
    %2 = tpu.matmul %0, %1, %cst {dimension_numbers = #tpu.dot_dimension_numbers<[1], [0], [0], [1], [0, 0, 1, 1], [], []>} : vector<256x64xf32>, vector<64x128xf32>, vector<256x128xf32> -> vector<256x128xf32>
    %c0_3 = arith.constant 0 : index
    %c0_4 = arith.constant 0 : index
    %3 = vector.load %arg3[%c0_3, %c0_4] : memref<1x128xf32, #tpu.memory_space<vmem>>, vector<1x128xf32>
    %4 = vector.broadcast %3 : vector<1x128xf32> to vector<256x128xf32>
    %5 = arith.addf %2, %4 : vector<256x128xf32>
    %6 = arith.truncf %5 : vector<256x128xf32> to vector<256x128xbf16>
    %c0_5 = arith.constant 0 : index
    %c0_6 = arith.constant 0 : index
    %7 = vector.load %arg4[%c0_5, %c0_6] : memref<256x128xbf16, #tpu.memory_space<vmem>>, vector<256x128xbf16>
    tpu.vector_store %arg4[%c0_5, %c0_6], %6 {strides = array<i32>} : memref<256x128xbf16, #tpu.memory_space<vmem>>, vector<256x128xbf16>,
    return
  }
  func.func @transform_0(%arg0: i32) -> (i32, i32) {
    %c0_i32 = arith.constant 0 : i32
    %c0_i32_0 = arith.constant 0 : i32
    return %arg0, %c0_i32 : i32, i32
  }
  func.func @transform_1(%arg0: i32) -> (i32, i32) {
    %c0_i32 = arith.constant 0 : i32
    %c0_i32_0 = arith.constant 0 : i32
    %c0_i32_1 = arith.constant 0 : i32
    return %c0_i32, %c0_i32_0 : i32, i32
  }
  func.func @transform_2(%arg0: i32) -> (i32, i32) {
    %c0_i32 = arith.constant 0 : i32
    %c0_i32_0 = arith.constant 0 : i32
    %c0_i32_1 = arith.constant 0 : i32
    return %c0_i32, %c0_i32_0 : i32, i32
  }
  func.func @transform_3(%arg0: i32) -> (i32, i32) {
    %c0_i32 = arith.constant 0 : i32
    %c0_i32_0 = arith.constant 0 : i32
    return %arg0, %c0_i32 : i32, i32
  }
}

module attributes {stable_mosaic.version = 11 : i64} {
  func.func @gcn_attn_kernel(%arg0: i32, %arg1: i32, %arg2: memref<256x128xbf16, #tpu.memory_space<vmem>>, %arg3: memref<1x128x128xbf16, #tpu.memory_space<vmem>>, %arg4: memref<1x256x256xbf16, #tpu.memory_space<vmem>>, %arg5: memref<1x1x128xf32, #tpu.memory_space<vmem>>, %arg6: memref<1x1x128xf32, #tpu.memory_space<vmem>>, %arg7: memref<128x128xbf16, #tpu.memory_space<vmem>>, %arg8: memref<1x128xf32, #tpu.memory_space<vmem>>, %arg9: memref<1x256x128xbf16, #tpu.memory_space<vmem>>, %arg10: memref<1x1x128xf32, #tpu.memory_space<vmem>>, %arg11: memref<256x128xbf16, #tpu.memory_space<vmem>>) attributes {dimension_semantics = [#tpu.dimension_semantics<parallel>, #tpu.dimension_semantics<arbitrary>], iteration_bounds = array<i64: 3, 1>, scalar_prefetch = 0 : i64, scratch_operands = 1 : i64, tpu.core_type = #tpu.core_type<tc>, window_params = [{pipeline_mode = #tpu.pipeline_mode<synchronous>, transform_indices = @transform_0, window_bounds = array<i64: 256, 128>}, {transform_indices = @transform_1, window_bounds = array<i64: 1, 128, 128>}, {transform_indices = @transform_2, window_bounds = array<i64: 1, 256, 256>}, {transform_indices = @transform_3, window_bounds = array<i64: 1, 1, 128>}, {transform_indices = @transform_4, window_bounds = array<i64: 1, 1, 128>}, {pipeline_mode = #tpu.pipeline_mode<synchronous>, transform_indices = @transform_5, window_bounds = array<i64: 128, 128>}, {pipeline_mode = #tpu.pipeline_mode<synchronous>, transform_indices = @transform_6, window_bounds = array<i64: 1, 128>}, {transform_indices = @transform_7, window_bounds = array<i64: 1, 256, 128>}, {transform_indices = @transform_8, window_bounds = array<i64: 1, 1, 128>}]} {
    %c0_i32 = arith.constant 0 : i32
    %0 = arith.cmpi eq, %arg1, %c0_i32 : i32
    %1 = arith.extui %0 : i1 to i32
    %c0_i32_0 = arith.constant 0 : i32
    %2 = arith.cmpi ne, %1, %c0_i32_0 : i32
    scf.if %2 {
      %c0_27 = arith.constant 0 : index
      %c0_28 = arith.constant 0 : index
      %36 = vector.load %arg2[%c0_27, %c0_28] : memref<256x128xbf16, #tpu.memory_space<vmem>>, vector<256x128xbf16>
      %c0_29 = arith.constant 0 : index
      %c0_30 = arith.constant 0 : index
      %c0_31 = arith.constant 0 : index
      %37 = vector.load %arg3[%c0_29, %c0_30, %c0_31] : memref<1x128x128xbf16, #tpu.memory_space<vmem>>, vector<1x128x128xbf16>
      %38 = vector.shape_cast %37 : vector<1x128x128xbf16> to vector<128x128xbf16>
      %cst_32 = arith.constant dense<0.000000e+00> : vector<256x128xf32>
      %39 = tpu.matmul %36, %38, %cst_32 {dimension_numbers = #tpu.dot_dimension_numbers<[1], [0], [0], [1], [0, 0, 1, 1], [], []>} : vector<256x128xbf16>, vector<128x128xbf16>, vector<256x128xf32> -> vector<256x128xf32>
      %40 = arith.truncf %39 : vector<256x128xf32> to vector<256x128xbf16>
      %c0_33 = arith.constant 0 : index
      %c0_34 = arith.constant 0 : index
      %41 = vector.load %arg11[%c0_33, %c0_34] : memref<256x128xbf16, #tpu.memory_space<vmem>>, vector<256x128xbf16>
      tpu.vector_store %arg11[%c0_33, %c0_34], %40 {strides = array<i32>} : memref<256x128xbf16, #tpu.memory_space<vmem>>, vector<256x128xbf16>,
      %cst_35 = arith.constant 0.000000e+00 : f32
      %42 = vector.broadcast %cst_35 : f32 to vector<1x128xf32>
      %c0_36 = arith.constant 0 : index
      %c0_37 = arith.constant 0 : index
      %c0_38 = arith.constant 0 : index
      %43 = vector.load %arg10[%c0_36, %c0_37, %c0_38] : memref<1x1x128xf32, #tpu.memory_space<vmem>>, vector<1x1x128xf32>
      %44 = vector.shape_cast %43 : vector<1x1x128xf32> to vector<1x128xf32>
      %45 = vector.shape_cast %42 : vector<1x128xf32> to vector<1x1x128xf32>
      tpu.vector_store %arg10[%c0_36, %c0_37, %c0_38], %45 {strides = array<i32>} : memref<1x1x128xf32, #tpu.memory_space<vmem>>, vector<1x1x128xf32>,
    } else {
    }
    %c0 = arith.constant 0 : index
    %c0_1 = arith.constant 0 : index
    %c0_2 = arith.constant 0 : index
    %3 = vector.load %arg4[%c0, %c0_1, %c0_2] : memref<1x256x256xbf16, #tpu.memory_space<vmem>>, vector<1x256x256xbf16>
    %4 = vector.shape_cast %3 : vector<1x256x256xbf16> to vector<256x256xbf16>
    %c0_3 = arith.constant 0 : index
    %c0_4 = arith.constant 0 : index
    %5 = vector.load %arg11[%c0_3, %c0_4] : memref<256x128xbf16, #tpu.memory_space<vmem>>, vector<256x128xbf16>
    %cst = arith.constant dense<0.000000e+00> : vector<256x128xf32>
    %6 = tpu.matmul %4, %5, %cst {dimension_numbers = #tpu.dot_dimension_numbers<[1], [0], [0], [1], [0, 0, 1, 1], [], []>} : vector<256x256xbf16>, vector<256x128xbf16>, vector<256x128xf32> -> vector<256x128xf32>
    %c0_5 = arith.constant 0 : index
    %c0_6 = arith.constant 0 : index
    %c0_7 = arith.constant 0 : index
    %7 = vector.load %arg5[%c0_5, %c0_6, %c0_7] : memref<1x1x128xf32, #tpu.memory_space<vmem>>, vector<1x1x128xf32>
    %8 = vector.shape_cast %7 : vector<1x1x128xf32> to vector<1x128xf32>
    %9 = vector.broadcast %8 : vector<1x128xf32> to vector<256x128xf32>
    %10 = arith.addf %6, %9 : vector<256x128xf32>
    %cst_8 = arith.constant 0.000000e+00 : f32
    %11 = vector.broadcast %cst_8 : f32 to vector<256x128xf32>
    %12 = arith.cmpf oge, %10, %11 : vector<256x128xf32>
    %c0_9 = arith.constant 0 : index
    %c0_10 = arith.constant 0 : index
    %c0_11 = arith.constant 0 : index
    %13 = vector.load %arg6[%c0_9, %c0_10, %c0_11] : memref<1x1x128xf32, #tpu.memory_space<vmem>>, vector<1x1x128xf32>
    %14 = vector.shape_cast %13 : vector<1x1x128xf32> to vector<1x128xf32>
    %15 = vector.broadcast %14 : vector<1x128xf32> to vector<256x128xf32>
    %16 = arith.mulf %15, %10 : vector<256x128xf32>
    %17 = arith.select %12, %10, %16 : vector<256x128xi1>, vector<256x128xf32>
    %18 = arith.truncf %17 : vector<256x128xf32> to vector<256x128xbf16>
    %c0_12 = arith.constant 0 : index
    %c0_13 = arith.constant 0 : index
    %c0_14 = arith.constant 0 : index
    %19 = vector.load %arg9[%c0_12, %c0_13, %c0_14] : memref<1x256x128xbf16, #tpu.memory_space<vmem>>, vector<1x256x128xbf16>
    %20 = vector.shape_cast %19 : vector<1x256x128xbf16> to vector<256x128xbf16>
    %21 = vector.shape_cast %18 : vector<256x128xbf16> to vector<1x256x128xbf16>
    tpu.vector_store %arg9[%c0_12, %c0_13, %c0_14], %21 {strides = array<i32>} : memref<1x256x128xbf16, #tpu.memory_space<vmem>>, vector<1x256x128xbf16>,
    %c0_15 = arith.constant 0 : index
    %c0_16 = arith.constant 0 : index
    %22 = vector.load %arg7[%c0_15, %c0_16] : memref<128x128xbf16, #tpu.memory_space<vmem>>, vector<128x128xbf16>
    %cst_17 = arith.constant dense<0.000000e+00> : vector<256x128xf32>
    %23 = tpu.matmul %18, %22, %cst_17 {dimension_numbers = #tpu.dot_dimension_numbers<[1], [0], [0], [1], [0, 0, 1, 1], [], []>} : vector<256x128xbf16>, vector<128x128xbf16>, vector<256x128xf32> -> vector<256x128xf32>
    %c0_18 = arith.constant 0 : index
    %c0_19 = arith.constant 0 : index
    %24 = vector.load %arg8[%c0_18, %c0_19] : memref<1x128xf32, #tpu.memory_space<vmem>>, vector<1x128xf32>
    %25 = vector.broadcast %24 : vector<1x128xf32> to vector<256x128xf32>
    %26 = arith.addf %23, %25 : vector<256x128xf32>
    %27 = math.tanh %26 : vector<256x128xf32>
    %c0_20 = arith.constant 0 : index
    %c0_21 = arith.constant 0 : index
    %c0_22 = arith.constant 0 : index
    %28 = vector.load %arg10[%c0_20, %c0_21, %c0_22] : memref<1x1x128xf32, #tpu.memory_space<vmem>>, vector<1x1x128xf32>
    %29 = vector.shape_cast %28 : vector<1x1x128xf32> to vector<1x128xf32>
    %cst_23 = arith.constant dense<0.000000e+00> : vector<128xf32>
    %30 = vector.multi_reduction <add>, %27, %cst_23 [0] : vector<256x128xf32> to vector<128xf32>
    %31 = vector.shape_cast %30 : vector<128xf32> to vector<1x128xf32>
    %32 = arith.addf %29, %31 : vector<1x128xf32>
    %c0_24 = arith.constant 0 : index
    %c0_25 = arith.constant 0 : index
    %c0_26 = arith.constant 0 : index
    %33 = vector.load %arg10[%c0_24, %c0_25, %c0_26] : memref<1x1x128xf32, #tpu.memory_space<vmem>>, vector<1x1x128xf32>
    %34 = vector.shape_cast %33 : vector<1x1x128xf32> to vector<1x128xf32>
    %35 = vector.shape_cast %32 : vector<1x128xf32> to vector<1x1x128xf32>
    tpu.vector_store %arg10[%c0_24, %c0_25, %c0_26], %35 {strides = array<i32>} : memref<1x1x128xf32, #tpu.memory_space<vmem>>, vector<1x1x128xf32>,
    return
  }
  func.func @transform_0(%arg0: i32, %arg1: i32) -> (i32, i32) {
    %c0_i32 = arith.constant 0 : i32
    %c0_i32_0 = arith.constant 0 : i32
    %c0_i32_1 = arith.constant 0 : i32
    return %c0_i32, %c0_i32_0 : i32, i32
  }
  func.func @transform_1(%arg0: i32, %arg1: i32) -> (i32, i32, i32) {
    %c0_i32 = arith.constant 0 : i32
    %c0_i32_0 = arith.constant 0 : i32
    %c0_i32_1 = arith.constant 0 : i32
    return %arg0, %c0_i32, %c0_i32_0 : i32, i32, i32
  }
  func.func @transform_2(%arg0: i32, %arg1: i32) -> (i32, i32, i32) {
    %c0_i32 = arith.constant 0 : i32
    %c0_i32_0 = arith.constant 0 : i32
    return %arg0, %arg1, %c0_i32 : i32, i32, i32
  }
  func.func @transform_3(%arg0: i32, %arg1: i32) -> (i32, i32, i32) {
    %c0_i32 = arith.constant 0 : i32
    %c0_i32_0 = arith.constant 0 : i32
    %c0_i32_1 = arith.constant 0 : i32
    return %arg0, %c0_i32, %c0_i32_0 : i32, i32, i32
  }
  func.func @transform_4(%arg0: i32, %arg1: i32) -> (i32, i32, i32) {
    %c0_i32 = arith.constant 0 : i32
    %c0_i32_0 = arith.constant 0 : i32
    %c0_i32_1 = arith.constant 0 : i32
    return %arg0, %c0_i32, %c0_i32_0 : i32, i32, i32
  }
  func.func @transform_5(%arg0: i32, %arg1: i32) -> (i32, i32) {
    %c0_i32 = arith.constant 0 : i32
    %c0_i32_0 = arith.constant 0 : i32
    %c0_i32_1 = arith.constant 0 : i32
    return %c0_i32, %c0_i32_0 : i32, i32
  }
  func.func @transform_6(%arg0: i32, %arg1: i32) -> (i32, i32) {
    %c0_i32 = arith.constant 0 : i32
    %c0_i32_0 = arith.constant 0 : i32
    %c0_i32_1 = arith.constant 0 : i32
    return %c0_i32, %c0_i32_0 : i32, i32
  }
  func.func @transform_7(%arg0: i32, %arg1: i32) -> (i32, i32, i32) {
    %c0_i32 = arith.constant 0 : i32
    %c0_i32_0 = arith.constant 0 : i32
    return %arg0, %arg1, %c0_i32 : i32, i32, i32
  }
  func.func @transform_8(%arg0: i32, %arg1: i32) -> (i32, i32, i32) {
    %c0_i32 = arith.constant 0 : i32
    %c0_i32_0 = arith.constant 0 : i32
    %c0_i32_1 = arith.constant 0 : i32
    return %arg0, %c0_i32, %c0_i32_0 : i32, i32, i32
  }
}

module attributes {stable_mosaic.version = 11 : i64} {
  func.func @combine_kernel(%arg0: i32, %arg1: memref<3x256x128xbf16, #tpu.memory_space<vmem>>, %arg2: memref<3x1x1xf32, #tpu.memory_space<vmem>>, %arg3: memref<256x128xf32, #tpu.memory_space<vmem>>) attributes {dimension_semantics = [#tpu.dimension_semantics<parallel>], iteration_bounds = array<i64: 1>, scalar_prefetch = 0 : i64, scratch_operands = 0 : i64, tpu.core_type = #tpu.core_type<tc>, window_params = [{transform_indices = @transform_0, window_bounds = array<i64: 3, 256, 128>}, {pipeline_mode = #tpu.pipeline_mode<synchronous>, transform_indices = @transform_1, window_bounds = array<i64: 3, 1, 1>}, {transform_indices = @transform_2, window_bounds = array<i64: 256, 128>}]} {
    %c0 = arith.constant 0 : index
    %c0_0 = arith.constant 0 : index
    %c0_1 = arith.constant 0 : index
    %0 = vector.load %arg1[%c0, %c0_0, %c0_1] : memref<3x256x128xbf16, #tpu.memory_space<vmem>>, vector<1x256x128xbf16>
    %1 = vector.shape_cast %0 : vector<1x256x128xbf16> to vector<256x128xbf16>
    %2 = arith.extf %1 : vector<256x128xbf16> to vector<256x128xf32>
    %c0_2 = arith.constant 0 : index
    %c0_3 = arith.constant 0 : index
    %c0_4 = arith.constant 0 : index
    %3 = vector.load %arg2[%c0_2, %c0_3, %c0_4] : memref<3x1x1xf32, #tpu.memory_space<vmem>>, vector<1x1x1xf32>
    %4 = vector.shape_cast %3 : vector<1x1x1xf32> to vector<1x1xf32>
    %5 = vector.broadcast %4 : vector<1x1xf32> to vector<256x128xf32>
    %6 = arith.mulf %2, %5 : vector<256x128xf32>
    %c1 = arith.constant 1 : index
    %c0_5 = arith.constant 0 : index
    %c0_6 = arith.constant 0 : index
    %7 = vector.load %arg1[%c1, %c0_5, %c0_6] : memref<3x256x128xbf16, #tpu.memory_space<vmem>>, vector<1x256x128xbf16>
    %8 = vector.shape_cast %7 : vector<1x256x128xbf16> to vector<256x128xbf16>
    %9 = arith.extf %8 : vector<256x128xbf16> to vector<256x128xf32>
    %c1_7 = arith.constant 1 : index
    %c0_8 = arith.constant 0 : index
    %c0_9 = arith.constant 0 : index
    %10 = vector.load %arg2[%c1_7, %c0_8, %c0_9] : memref<3x1x1xf32, #tpu.memory_space<vmem>>, vector<1x1x1xf32>
    %11 = vector.shape_cast %10 : vector<1x1x1xf32> to vector<1x1xf32>
    %12 = vector.broadcast %11 : vector<1x1xf32> to vector<256x128xf32>
    %13 = arith.mulf %9, %12 : vector<256x128xf32>
    %14 = arith.addf %6, %13 : vector<256x128xf32>
    %c2 = arith.constant 2 : index
    %c0_10 = arith.constant 0 : index
    %c0_11 = arith.constant 0 : index
    %15 = vector.load %arg1[%c2, %c0_10, %c0_11] : memref<3x256x128xbf16, #tpu.memory_space<vmem>>, vector<1x256x128xbf16>
    %16 = vector.shape_cast %15 : vector<1x256x128xbf16> to vector<256x128xbf16>
    %17 = arith.extf %16 : vector<256x128xbf16> to vector<256x128xf32>
    %c2_12 = arith.constant 2 : index
    %c0_13 = arith.constant 0 : index
    %c0_14 = arith.constant 0 : index
    %18 = vector.load %arg2[%c2_12, %c0_13, %c0_14] : memref<3x1x1xf32, #tpu.memory_space<vmem>>, vector<1x1x1xf32>
    %19 = vector.shape_cast %18 : vector<1x1x1xf32> to vector<1x1xf32>
    %20 = vector.broadcast %19 : vector<1x1xf32> to vector<256x128xf32>
    %21 = arith.mulf %17, %20 : vector<256x128xf32>
    %22 = arith.addf %14, %21 : vector<256x128xf32>
    %c0_15 = arith.constant 0 : index
    %c0_16 = arith.constant 0 : index
    %23 = vector.load %arg3[%c0_15, %c0_16] : memref<256x128xf32, #tpu.memory_space<vmem>>, vector<256x128xf32>
    tpu.vector_store %arg3[%c0_15, %c0_16], %22 {strides = array<i32>} : memref<256x128xf32, #tpu.memory_space<vmem>>, vector<256x128xf32>,
    return
  }
  func.func @transform_0(%arg0: i32) -> (i32, i32, i32) {
    %c0_i32 = arith.constant 0 : i32
    %c0_i32_0 = arith.constant 0 : i32
    %c0_i32_1 = arith.constant 0 : i32
    return %c0_i32, %arg0, %c0_i32_0 : i32, i32, i32
  }
  func.func @transform_1(%arg0: i32) -> (i32, i32, i32) {
    %c0_i32 = arith.constant 0 : i32
    %c0_i32_0 = arith.constant 0 : i32
    %c0_i32_1 = arith.constant 0 : i32
    %c0_i32_2 = arith.constant 0 : i32
    return %c0_i32, %c0_i32_0, %c0_i32_1 : i32, i32, i32
  }
  func.func @transform_2(%arg0: i32) -> (i32, i32) {
    %c0_i32 = arith.constant 0 : i32
    %c0_i32_0 = arith.constant 0 : i32
    return %arg0, %c0_i32 : i32, i32
  }
}

</mosaic_0001>

<llo_original>
// kernel: mp_encoder_forward.3
$region0: #{mp_encoder_forward.3}
  #allocation0 [shape = 'u32[]', space=smem, size = 0x4, offset = 0x4, fixed_abs, tag = 'smem constant byte address 0x4 - core index']
  #allocation1 [shape = 'u32[144,128]{1,0:T(1,128)}', space=vmem, size = 0x12000, scoped, tag = 'internal scratch']
  %s0 = inlined_call_operand.vmem [shape: f32[256,64], index: 0, kind: input, shape index: {}]
  %s1 = inlined_call_operand.vmem [shape: f32[64,128], index: 1, kind: input, shape index: {}]
  %s2 = inlined_call_operand.vmem [shape: f32[1,128], index: 2, kind: input, shape index: {}]
  %s3 = inlined_call_operand.vmem [shape: bf16[256,128], index: 3, kind: output, shape index: {}]
  %s4 = sld [smem:[#allocation0]]
  $region22: #{mp_encoder_forward.3} parent=0
    _
  %s6 = ssub.s32 1, %s4
  %s7 = scalar_select 0, %s6, %s4
  // Predicated region
  $region2: #{mp_encoder_forward.3} parent=0 // pred_check
    _
  $region3: #{mp_encoder_forward.3} parent=0 // pred_check_branch
    %9 = sbr.rel (0) target = $region5
  $region4: #{mp_encoder_forward.3} parent=0 // pred_region
    _
  $region5: #{mp_encoder_forward.3} parent=0 // pred_fallthru
    _
  // Predicated region
  $region6: #{mp_encoder_forward.3} parent=0 // pred_check
    _
  $region7: #{mp_encoder_forward.3} parent=0 // pred_check_branch
    %11 = sbr.rel (0) target = $region9
  $region8: #{mp_encoder_forward.3} parent=0 // pred_region
    _
  $region9: #{mp_encoder_forward.3} parent=0 // pred_fallthru
    _
  // Predicated region
  $region10: #{mp_encoder_forward.3} parent=0 // pred_check
    _
  $region11: #{mp_encoder_forward.3} parent=0 // pred_check_branch
    %13 = sbr.rel (0) target = $region13
  $region12: #{mp_encoder_forward.3} parent=0 // pred_region
    _
  $region13: #{mp_encoder_forward.3} parent=0 // pred_fallthru
    _
  %v14 = vld [vmem:[%s0] sm:$0xff]
  %v15 = vld [vmem:[%s0 + $0x8] sm:$0xff]
  %v16 = vld [vmem:[%s0 + $0x10] sm:$0xff]
  %v17 = vld [vmem:[%s0 + $0x18] sm:$0xff]
  %v18 = vld [vmem:[%s0 + $0x20] sm:$0xff]
  %v19 = vld [vmem:[%s0 + $0x28] sm:$0xff]
  %v20 = vld [vmem:[%s0 + $0x30] sm:$0xff]
  %v21 = vld [vmem:[%s0 + $0x38] sm:$0xff]
  %v22 = vld [vmem:[%s0 + $0x40] sm:$0xff]
  %v23 = vld [vmem:[%s0 + $0x48] sm:$0xff]
  %v24 = vld [vmem:[%s0 + $0x50] sm:$0xff]
  %v25 = vld [vmem:[%s0 + $0x58] sm:$0xff]
  %v26 = vld [vmem:[%s0 + $0x60] sm:$0xff]
  %v27 = vld [vmem:[%s0 + $0x68] sm:$0xff]
  %v28 = vld [vmem:[%s0 + $0x70] sm:$0xff]
  %v29 = vld [vmem:[%s0 + $0x78] sm:$0xff]
  %v30 = vld [vmem:[%s0 + $0x80] sm:$0xff]
  %v31 = vld [vmem:[%s0 + $0x88] sm:$0xff]
  %v32 = vld [vmem:[%s0 + $0x90] sm:$0xff]
  %v33 = vld [vmem:[%s0 + $0x98] sm:$0xff]
  %v34 = vld [vmem:[%s0 + $0xa0] sm:$0xff]
  %v35 = vld [vmem:[%s0 + $0xa8] sm:$0xff]
  %v36 = vld [vmem:[%s0 + $0xb0] sm:$0xff]
  %v37 = vld [vmem:[%s0 + $0xb8] sm:$0xff]
  %v38 = vld [vmem:[%s0 + $0xc0] sm:$0xff]
  %v39 = vld [vmem:[%s0 + $0xc8] sm:$0xff]
  %v40 = vld [vmem:[%s0 + $0xd0] sm:$0xff]
  %v41 = vld [vmem:[%s0 + $0xd8] sm:$0xff]
  %v42 = vld [vmem:[%s0 + $0xe0] sm:$0xff]
  %v43 = vld [vmem:[%s0 + $0xe8] sm:$0xff]
  %v44 = vld [vmem:[%s0 + $0xf0] sm:$0xff]
  %v45 = vld [vmem:[%s0 + $0xf8] sm:$0xff]
  %v46 = vld [vmem:[%s1] sm:$0xff]
  %v47 = vld [vmem:[%s1 + $0x8] sm:$0xff]
  %v48 = vld [vmem:[%s1 + $0x10] sm:$0xff]
  %v49 = vld [vmem:[%s1 + $0x18] sm:$0xff]
  %v50 = vld [vmem:[%s1 + $0x20] sm:$0xff]
  %v51 = vld [vmem:[%s1 + $0x28] sm:$0xff]
  %v52 = vld [vmem:[%s1 + $0x30] sm:$0xff]
  %v53 = vld [vmem:[%s1 + $0x38] sm:$0xff]
  %v54 = vld [vmem:[%s2] sm:$0x1]
  %v56 = vlaneseq
  %v57 = vshrl.u32 %v56, 7
  %v58 = vsub.s32 0, %v57
  %v59 = vrot.slane %v54, %v58
  %vm61 = vcmask 523264
  %v63 = vsel %vm61, %v14, 0
  %v66 = vsel %vm61, %v15, 0
  %v69 = vsel %vm61, %v16, 0
  %v72 = vsel %vm61, %v17, 0
  %v75 = vsel %vm61, %v18, 0
  %v78 = vsel %vm61, %v19, 0
  %v81 = vsel %vm61, %v20, 0
  %v84 = vsel %vm61, %v21, 0
  %v87 = vsel %vm61, %v22, 0
  %v90 = vsel %vm61, %v23, 0
  %v93 = vsel %vm61, %v24, 0
  %v96 = vsel %vm61, %v25, 0
  %v99 = vsel %vm61, %v26, 0
  %v102 = vsel %vm61, %v27, 0
  %v105 = vsel %vm61, %v28, 0
  %v108 = vsel %vm61, %v29, 0
  %v111 = vsel %vm61, %v30, 0
  %v114 = vsel %vm61, %v31, 0
  %v117 = vsel %vm61, %v32, 0
  %v120 = vsel %vm61, %v33, 0
  %v123 = vsel %vm61, %v34, 0
  %v126 = vsel %vm61, %v35, 0
  %v129 = vsel %vm61, %v36, 0
  %v132 = vsel %vm61, %v37, 0
  %v135 = vsel %vm61, %v38, 0
  %v138 = vsel %vm61, %v39, 0
  %v141 = vsel %vm61, %v40, 0
  %v144 = vsel %vm61, %v41, 0
  %v147 = vsel %vm61, %v42, 0
  %v150 = vsel %vm61, %v43, 0
  %v153 = vsel %vm61, %v44, 0
  %v156 = vsel %vm61, %v45, 0
  %158 = vmatprep.subr.mxu0 0.0
  %159 = vmatpush1.msra.mxu0 %v46
  %160 = vmatprep.subr.mxu0 0.0
  %161 = vmatpush1.msra.mxu0 %v47
  %162 = vmatprep.subr.mxu0 0.0
  %163 = vmatpush1.msra.mxu0 %v48
  %164 = vmatprep.subr.mxu0 0.0
  %165 = vmatpush1.msra.mxu0 %v49
  %166 = vmatprep.subr.mxu0 0.0
  %167 = vmatpush1.msra.mxu0 %v50
  %168 = vmatprep.subr.mxu0 0.0
  %169 = vmatpush1.msra.mxu0 %v51
  %170 = vmatprep.subr.mxu0 0.0
  %171 = vmatpush1.msra.mxu0 %v52
  %172 = vmatprep.subr.mxu0 0.0
  %173 = vmatpush1.msra.mxu0 %v53
  %174 = vmatprep.subr.mxu0 0.0
  %175 = vmatpush1.msra.mxu0 0.0
  %176 = vmatprep.subr.mxu0 0.0
  %177 = vmatpush1.msra.mxu0 0.0
  %178 = vmatprep.subr.mxu0 0.0
  %179 = vmatpush1.msra.mxu0 0.0
  %180 = vmatprep.subr.mxu0 0.0
  %181 = vmatpush1.msra.mxu0 0.0
  %182 = vmatprep.subr.mxu0 0.0
  %183 = vmatpush1.msra.mxu0 0.0
  %184 = vmatprep.subr.mxu0 0.0
  %185 = vmatpush1.msra.mxu0 0.0
  %186 = vmatprep.subr.mxu0 0.0
  %187 = vmatpush1.msra.mxu0 0.0
  %188 = vmatprep.subr.mxu0 0.0
  %189 = vmatpush1.msra.mxu0 0.0
  %190 = vmatprep.subr.mxu0 0.0
  %191 = vmatpush1.msra.mxu0 0.0
  %192 = vmatprep.subr.mxu0 0.0
  %193 = vmatpush1.msra.mxu0 0.0
  %194 = vmatprep.subr.mxu0 0.0
  %195 = vmatpush1.msra.mxu0 0.0
  %196 = vmatprep.subr.mxu0 0.0
  %197 = vmatpush1.msra.mxu0 0.0
  %198 = vmatprep.subr.mxu0 0.0
  %199 = vmatpush1.msra.mxu0 0.0
  %200 = vmatprep.subr.mxu0 0.0
  %201 = vmatpush1.msra.mxu0 0.0
  %202 = vmatprep.subr.mxu0 0.0
  %203 = vmatpush1.msra.mxu0 0.0
  %204 = vmatprep.subr.mxu0 0.0
  %205 = vmatpush1.msra.mxu0 0.0
  %206 = vmatprep.subr.mxu0 0.0
  %207 = vmatpush1.msra.mxu0 0.0
  %208 = vmatprep.subr.mxu0 0.0
  %209 = vmatpush1.msra.mxu0 0.0
  %210 = vmatprep.subr.mxu0 0.0
  %211 = vmatpush1.msra.mxu0 0.0
  %212 = vmatprep.subr.mxu0 0.0
  %213 = vmatpush1.msra.mxu0 0.0
  %214 = vmatprep.subr.mxu0 0.0
  %215 = vmatpush1.msra.mxu0 0.0
  %216 = vmatprep.subr.mxu0 0.0
  %217 = vmatpush1.msra.mxu0 0.0
  %218 = vmatprep.subr.mxu0 0.0
  %219 = vmatpush1.msra.mxu0 0.0
  %220 = vmatprep.subr.mxu0 0.0
  %221 = vmatpush1.msra.mxu0 0.0
  %222 = vmatprep.mubr.f32.mxu0 0.0
  %223 = vmatmul.mubr.f32.gmra.mrb[0].mxu0 %v63
  %v224 = vpop.f32.mrb[0].mxu0
  %v225 = vadd.f32 %v59, %v224
  %v226 = vpop.f32.mrb[0].mxu0
  %227 = vmatprep.mubr.f32.mxu0 0.0
  %228 = vmatmul.mubr.f32.gmra.mrb[0].mxu0 %v66
  %v229 = vpop.f32.mrb[0].mxu0
  %v230 = vadd.f32 %v59, %v229
  %v231 = vpop.f32.mrb[0].mxu0
  %232 = vmatprep.mubr.f32.mxu0 0.0
  %233 = vmatmul.mubr.f32.gmra.mrb[0].mxu0 %v69
  %v234 = vpop.f32.mrb[0].mxu0
  %v235 = vadd.f32 %v59, %v234
  %v236 = vpop.f32.mrb[0].mxu0
  %237 = vmatprep.mubr.f32.mxu0 0.0
  %238 = vmatmul.mubr.f32.gmra.mrb[0].mxu0 %v72
  %v239 = vpop.f32.mrb[0].mxu0
  %v240 = vadd.f32 %v59, %v239
  %v241 = vpop.f32.mrb[0].mxu0
  %242 = vmatprep.mubr.f32.mxu0 0.0
  %243 = vmatmul.mubr.f32.gmra.mrb[0].mxu0 %v75
  %v244 = vpop.f32.mrb[0].mxu0
  %v245 = vadd.f32 %v59, %v244
  %v246 = vpop.f32.mrb[0].mxu0
  %247 = vmatprep.mubr.f32.mxu0 0.0
  %248 = vmatmul.mubr.f32.gmra.mrb[0].mxu0 %v78
  %v249 = vpop.f32.mrb[0].mxu0
  %v250 = vadd.f32 %v59, %v249
  %v251 = vpop.f32.mrb[0].mxu0
  %252 = vmatprep.mubr.f32.mxu0 0.0
  %253 = vmatmul.mubr.f32.gmra.mrb[0].mxu0 %v81
  %v254 = vpop.f32.mrb[0].mxu0
  %v255 = vadd.f32 %v59, %v254
  %v256 = vpop.f32.mrb[0].mxu0
  %257 = vmatprep.mubr.f32.mxu0 0.0
  %258 = vmatmul.mubr.f32.gmra.mrb[0].mxu0 %v84
  %v259 = vpop.f32.mrb[0].mxu0
  %v260 = vadd.f32 %v59, %v259
  %v261 = vpop.f32.mrb[0].mxu0
  %262 = vmatprep.mubr.f32.mxu0 0.0
  %263 = vmatmul.mubr.f32.gmra.mrb[0].mxu0 %v87
  %v264 = vpop.f32.mrb[0].mxu0
  %v265 = vadd.f32 %v59, %v264
  %v266 = vpop.f32.mrb[0].mxu0
  %267 = vmatprep.mubr.f32.mxu0 0.0
  %268 = vmatmul.mubr.f32.gmra.mrb[0].mxu0 %v90
  %v269 = vpop.f32.mrb[0].mxu0
  %v270 = vadd.f32 %v59, %v269
  %v271 = vpop.f32.mrb[0].mxu0
  %272 = vmatprep.mubr.f32.mxu0 0.0
  %273 = vmatmul.mubr.f32.gmra.mrb[0].mxu0 %v93
  %v274 = vpop.f32.mrb[0].mxu0
  %v275 = vadd.f32 %v59, %v274
  %v276 = vpop.f32.mrb[0].mxu0
  %277 = vmatprep.mubr.f32.mxu0 0.0
  %278 = vmatmul.mubr.f32.gmra.mrb[0].mxu0 %v96
  %v279 = vpop.f32.mrb[0].mxu0
  %v280 = vadd.f32 %v59, %v279
  %v281 = vpop.f32.mrb[0].mxu0
  %282 = vmatprep.mubr.f32.mxu0 0.0
  %283 = vmatmul.mubr.f32.gmra.mrb[0].mxu0 %v99
  %v284 = vpop.f32.mrb[0].mxu0
  %v285 = vadd.f32 %v59, %v284
  %v286 = vpop.f32.mrb[0].mxu0
  %287 = vmatprep.mubr.f32.mxu0 0.0
  %288 = vmatmul.mubr.f32.gmra.mrb[0].mxu0 %v102
  %v289 = vpop.f32.mrb[0].mxu0
  %v290 = vadd.f32 %v59, %v289
  %v291 = vpop.f32.mrb[0].mxu0
  %292 = vmatprep.mubr.f32.mxu0 0.0
  %293 = vmatmul.mubr.f32.gmra.mrb[0].mxu0 %v105
  %v294 = vpop.f32.mrb[0].mxu0
  %v295 = vadd.f32 %v59, %v294
  %v296 = vpop.f32.mrb[0].mxu0
  %297 = vmatprep.mubr.f32.mxu0 0.0
  %298 = vmatmul.mubr.f32.gmra.mrb[0].mxu0 %v108
  %v299 = vpop.f32.mrb[0].mxu0
  %v300 = vadd.f32 %v59, %v299
  %v301 = vpop.f32.mrb[0].mxu0
  %302 = vmatprep.mubr.f32.mxu0 0.0
  %303 = vmatmul.mubr.f32.gmra.mrb[0].mxu0 %v111
  %v304 = vpop.f32.mrb[0].mxu0
  %v305 = vadd.f32 %v59, %v304
  %v306 = vpop.f32.mrb[0].mxu0
  %307 = vmatprep.mubr.f32.mxu0 0.0
  %308 = vmatmul.mubr.f32.gmra.mrb[0].mxu0 %v114
  %v309 = vpop.f32.mrb[0].mxu0
  %v310 = vadd.f32 %v59, %v309
  %v311 = vpop.f32.mrb[0].mxu0
  %312 = vmatprep.mubr.f32.mxu0 0.0
  %313 = vmatmul.mubr.f32.gmra.mrb[0].mxu0 %v117
  %v314 = vpop.f32.mrb[0].mxu0
  %v315 = vadd.f32 %v59, %v314
  %v316 = vpop.f32.mrb[0].mxu0
  %317 = vmatprep.mubr.f32.mxu0 0.0
  %318 = vmatmul.mubr.f32.gmra.mrb[0].mxu0 %v120
  %v319 = vpop.f32.mrb[0].mxu0
  %v320 = vadd.f32 %v59, %v319
  %v321 = vpop.f32.mrb[0].mxu0
  %322 = vmatprep.mubr.f32.mxu0 0.0
  %323 = vmatmul.mubr.f32.gmra.mrb[0].mxu0 %v123
  %v324 = vpop.f32.mrb[0].mxu0
  %v325 = vadd.f32 %v59, %v324
  %v326 = vpop.f32.mrb[0].mxu0
  %327 = vmatprep.mubr.f32.mxu0 0.0
  %328 = vmatmul.mubr.f32.gmra.mrb[0].mxu0 %v126
  %v329 = vpop.f32.mrb[0].mxu0
  %v330 = vadd.f32 %v59, %v329
  %v331 = vpop.f32.mrb[0].mxu0
  %332 = vmatprep.mubr.f32.mxu0 0.0
  %333 = vmatmul.mubr.f32.gmra.mrb[0].mxu0 %v129
  %v334 = vpop.f32.mrb[0].mxu0
  %v335 = vadd.f32 %v59, %v334
  %v336 = vpop.f32.mrb[0].mxu0
  %337 = vmatprep.mubr.f32.mxu0 0.0
  %338 = vmatmul.mubr.f32.gmra.mrb[0].mxu0 %v132
  %v339 = vpop.f32.mrb[0].mxu0
  %v340 = vadd.f32 %v59, %v339
  %v341 = vpop.f32.mrb[0].mxu0
  %342 = vmatprep.mubr.f32.mxu0 0.0
  %343 = vmatmul.mubr.f32.gmra.mrb[0].mxu0 %v135
  %v344 = vpop.f32.mrb[0].mxu0
  %v345 = vadd.f32 %v59, %v344
  %v346 = vpop.f32.mrb[0].mxu0
  %347 = vmatprep.mubr.f32.mxu0 0.0
  %348 = vmatmul.mubr.f32.gmra.mrb[0].mxu0 %v138
  %v349 = vpop.f32.mrb[0].mxu0
  %v350 = vadd.f32 %v59, %v349
  %v351 = vpop.f32.mrb[0].mxu0
  %352 = vmatprep.mubr.f32.mxu0 0.0
  %353 = vmatmul.mubr.f32.gmra.mrb[0].mxu0 %v141
  %v354 = vpop.f32.mrb[0].mxu0
  %v355 = vadd.f32 %v59, %v354
  %v356 = vpop.f32.mrb[0].mxu0
  %357 = vmatprep.mubr.f32.mxu0 0.0
  %358 = vmatmul.mubr.f32.gmra.mrb[0].mxu0 %v144
  %v359 = vpop.f32.mrb[0].mxu0
  %v360 = vadd.f32 %v59, %v359
  %v361 = vpop.f32.mrb[0].mxu0
  %362 = vmatprep.mubr.f32.mxu0 0.0
  %363 = vmatmul.mubr.f32.gmra.mrb[0].mxu0 %v147
  %v364 = vpop.f32.mrb[0].mxu0
  %v365 = vadd.f32 %v59, %v364
  %v366 = vpop.f32.mrb[0].mxu0
  %367 = vmatprep.mubr.f32.mxu0 0.0
  %368 = vmatmul.mubr.f32.gmra.mrb[0].mxu0 %v150
  %v369 = vpop.f32.mrb[0].mxu0
  %v370 = vadd.f32 %v59, %v369
  %v371 = vpop.f32.mrb[0].mxu0
  %372 = vmatprep.mubr.f32.mxu0 0.0
  %373 = vmatmul.mubr.f32.gmra.mrb[0].mxu0 %v153
  %v374 = vpop.f32.mrb[0].mxu0
  %v375 = vadd.f32 %v59, %v374
  %v376 = vpop.f32.mrb[0].mxu0
  %377 = vmatprep.mubr.f32.mxu0 0.0
  %378 = vmatmul.mubr.f32.gmra.mrb[0].mxu0 %v156
  %v379 = vpop.f32.mrb[0].mxu0
  %v380 = vadd.f32 %v59, %v379
  %v381 = vpop.f32.mrb[0].mxu0
  %382 = vdwg.mxu0
  %v383 = vpack.c.bf16 %v230, %v225
  %v384 = vpack.c.bf16 %v240, %v235
  %v385 = vpack.c.bf16 %v250, %v245
  %v386 = vpack.c.bf16 %v260, %v255
  %v387 = vpack.c.bf16 %v270, %v265
  %v388 = vpack.c.bf16 %v280, %v275
  %v389 = vpack.c.bf16 %v290, %v285
  %v390 = vpack.c.bf16 %v300, %v295
  %v391 = vpack.c.bf16 %v310, %v305
  %v392 = vpack.c.bf16 %v320, %v315
  %v393 = vpack.c.bf16 %v330, %v325
  %v394 = vpack.c.bf16 %v340, %v335
  %v395 = vpack.c.bf16 %v350, %v345
  %v396 = vpack.c.bf16 %v360, %v355
  %v397 = vpack.c.bf16 %v370, %v365
  %v398 = vpack.c.bf16 %v380, %v375
  %v415 = vunpack.c.l.b16 %v383
  %v416 = vunpack.c.h.b16 %v383
  %v417 = vunpack.c.l.b16 %v384
  %v418 = vunpack.c.h.b16 %v384
  %v419 = vunpack.c.l.b16 %v385
  %v420 = vunpack.c.h.b16 %v385
  %v421 = vunpack.c.l.b16 %v386
  %v422 = vunpack.c.h.b16 %v386
  %v423 = vunpack.c.l.b16 %v387
  %v424 = vunpack.c.h.b16 %v387
  %v425 = vunpack.c.l.b16 %v388
  %v426 = vunpack.c.h.b16 %v388
  %v427 = vunpack.c.l.b16 %v389
  %v428 = vunpack.c.h.b16 %v389
  %v429 = vunpack.c.l.b16 %v390
  %v430 = vunpack.c.h.b16 %v390
  %v431 = vunpack.c.l.b16 %v391
  %v432 = vunpack.c.h.b16 %v391
  %v433 = vunpack.c.l.b16 %v392
  %v434 = vunpack.c.h.b16 %v392
  %v435 = vunpack.c.l.b16 %v393
  %v436 = vunpack.c.h.b16 %v393
  %v437 = vunpack.c.l.b16 %v394
  %v438 = vunpack.c.h.b16 %v394
  %v439 = vunpack.c.l.b16 %v395
  %v440 = vunpack.c.h.b16 %v395
  %v441 = vunpack.c.l.b16 %v396
  %v442 = vunpack.c.h.b16 %v396
  %v443 = vunpack.c.l.b16 %v397
  %v444 = vunpack.c.h.b16 %v397
  %v445 = vunpack.c.l.b16 %v398
  %v446 = vunpack.c.h.b16 %v398
  %v447 = vpack.c.b16 %v415, %v415
  %v448 = vpack.c.b16 %v416, %v416
  %v449 = vpack.c.b16 %v417, %v417
  %v450 = vpack.c.b16 %v418, %v418
  %v451 = vpack.c.b16 %v419, %v419
  %v452 = vpack.c.b16 %v420, %v420
  %v453 = vpack.c.b16 %v421, %v421
  %v454 = vpack.c.b16 %v422, %v422
  %v455 = vpack.c.b16 %v423, %v423
  %v456 = vpack.c.b16 %v424, %v424
  %v457 = vpack.c.b16 %v425, %v425
  %v458 = vpack.c.b16 %v426, %v426
  %v459 = vpack.c.b16 %v427, %v427
  %v460 = vpack.c.b16 %v428, %v428
  %v461 = vpack.c.b16 %v429, %v429
  %v462 = vpack.c.b16 %v430, %v430
  %v463 = vpack.c.b16 %v431, %v431
  %v464 = vpack.c.b16 %v432, %v432
  %v465 = vpack.c.b16 %v433, %v433
  %v466 = vpack.c.b16 %v434, %v434
  %v467 = vpack.c.b16 %v435, %v435
  %v468 = vpack.c.b16 %v436, %v436
  %v469 = vpack.c.b16 %v437, %v437
  %v470 = vpack.c.b16 %v438, %v438
  %v471 = vpack.c.b16 %v439, %v439
  %v472 = vpack.c.b16 %v440, %v440
  %v473 = vpack.c.b16 %v441, %v441
  %v474 = vpack.c.b16 %v442, %v442
  %v475 = vpack.c.b16 %v443, %v443
  %v476 = vpack.c.b16 %v444, %v444
  %v477 = vpack.c.b16 %v445, %v445
  %v478 = vpack.c.b16 %v446, %v446
  %511 = vst [vmem:[%s3] sm:$0xf] %v447
  %512 = vst [vmem:[%s3 + $0x4] sm:$0xf] %v448
  %513 = vst [vmem:[%s3 + $0x8] sm:$0xf] %v449
  %514 = vst [vmem:[%s3 + $0xc] sm:$0xf] %v450
  %515 = vst [vmem:[%s3 + $0x10] sm:$0xf] %v451
  %516 = vst [vmem:[%s3 + $0x14] sm:$0xf] %v452
  %517 = vst [vmem:[%s3 + $0x18] sm:$0xf] %v453
  %518 = vst [vmem:[%s3 + $0x1c] sm:$0xf] %v454
  %519 = vst [vmem:[%s3 + $0x20] sm:$0xf] %v455
  %520 = vst [vmem:[%s3 + $0x24] sm:$0xf] %v456
  %521 = vst [vmem:[%s3 + $0x28] sm:$0xf] %v457
  %522 = vst [vmem:[%s3 + $0x2c] sm:$0xf] %v458
  %523 = vst [vmem:[%s3 + $0x30] sm:$0xf] %v459
  %524 = vst [vmem:[%s3 + $0x34] sm:$0xf] %v460
  %525 = vst [vmem:[%s3 + $0x38] sm:$0xf] %v461
  %526 = vst [vmem:[%s3 + $0x3c] sm:$0xf] %v462
  %527 = vst [vmem:[%s3 + $0x40] sm:$0xf] %v463
  %528 = vst [vmem:[%s3 + $0x44] sm:$0xf] %v464
  %529 = vst [vmem:[%s3 + $0x48] sm:$0xf] %v465
  %530 = vst [vmem:[%s3 + $0x4c] sm:$0xf] %v466
  %531 = vst [vmem:[%s3 + $0x50] sm:$0xf] %v467
  %532 = vst [vmem:[%s3 + $0x54] sm:$0xf] %v468
  %533 = vst [vmem:[%s3 + $0x58] sm:$0xf] %v469
  %534 = vst [vmem:[%s3 + $0x5c] sm:$0xf] %v470
  %535 = vst [vmem:[%s3 + $0x60] sm:$0xf] %v471
  %536 = vst [vmem:[%s3 + $0x64] sm:$0xf] %v472
  %537 = vst [vmem:[%s3 + $0x68] sm:$0xf] %v473
  %538 = vst [vmem:[%s3 + $0x6c] sm:$0xf] %v474
  %539 = vst [vmem:[%s3 + $0x70] sm:$0xf] %v475
  %540 = vst [vmem:[%s3 + $0x74] sm:$0xf] %v476
  %541 = vst [vmem:[%s3 + $0x78] sm:$0xf] %v477
  %542 = vst [vmem:[%s3 + $0x7c] sm:$0xf] %v478
  // Predicated region
  $region14: #{mp_encoder_forward.3} parent=0 // pred_check
    _
  $region15: #{mp_encoder_forward.3} parent=0 // pred_check_branch
    %544 = sbr.rel (0) target = $region17
  $region16: #{mp_encoder_forward.3} parent=0 // pred_region
    _
  $region17: #{mp_encoder_forward.3} parent=0 // pred_fallthru
    _
  // Predicated region
  $region18: #{mp_encoder_forward.3} parent=0 // pred_check
    _
  $region19: #{mp_encoder_forward.3} parent=0 // pred_check_branch
    %546 = sbr.rel (0) target = $region21
  $region20: #{mp_encoder_forward.3} parent=0 // pred_region
    _
  $region21: #{mp_encoder_forward.3} parent=0 // pred_fallthru
    _

// kernel: mp_encoder_forward.5
$region0: #{mp_encoder_forward.5}
  #allocation0 [shape = 'u32[]', space=smem, size = 0x4, offset = 0x4, fixed_abs, tag = 'smem constant byte address 0x4 - core index']
  #allocation1 [shape = 'u32[144,128]{1,0:T(1,128)}', space=vmem, size = 0x12000, scoped, tag = 'internal scratch']
  %s0 = inlined_call_operand.vmem [shape: bf16[3,256,128], index: 0, kind: input, shape index: {}]
  %s1 = inlined_call_operand.vmem [shape: f32[3,1,1], index: 1, kind: input, shape index: {}]
  %s2 = inlined_call_operand.hbm [shape: f32[256,128], index: 2, kind: output, shape index: {}]
  %s3 = sld [smem:[#allocation0]]
  $region18: #{mp_encoder_forward.5} parent=0
    _
  %s5 = ssub.s32 1, %s3
  %s6 = scalar_select 0, %s5, %s3
  $region1: #{mp_encoder_forward.5} parent=0
    #allocation2 [shape = 'u8[131072]{0}', space=vmem, size = 0x20000, scoped, tag = 'output window, operand 0, single buffered']
    #allocation3 [shape = 's32[1]{0}', space=sflag, size = 0x4, scoped, tag = 'scoped memory for mp_encoder_forward.5']
    %7 = vsyncpa [#allocation3], 0
    // Predicated region
    $region2: #{mp_encoder_forward.5} parent=1 // pred_check
      _
    $region3: #{mp_encoder_forward.5} parent=1 // pred_check_branch
      %9 = sbr.rel (0) target = $region5
    $region4: #{mp_encoder_forward.5} parent=1 // pred_region
      _
    $region5: #{mp_encoder_forward.5} parent=1 // pred_fallthru
      _
    // Predicated region
    $region6: #{mp_encoder_forward.5} parent=1 // pred_check
      _
    $region7: #{mp_encoder_forward.5} parent=1 // pred_check_branch
      %11 = sbr.rel (0) target = $region9
    $region8: #{mp_encoder_forward.5} parent=1 // pred_region
      _
    $region9: #{mp_encoder_forward.5} parent=1 // pred_fallthru
      _
    %v12 = vld [vmem:[%s0] sm:$0xf]
    %v13 = vld [vmem:[%s0 + $0x4] sm:$0xf]
    %v14 = vld [vmem:[%s0 + $0x8] sm:$0xf]
    %v15 = vld [vmem:[%s0 + $0xc] sm:$0xf]
    %v16 = vld [vmem:[%s0 + $0x10] sm:$0xf]
    %v17 = vld [vmem:[%s0 + $0x14] sm:$0xf]
    %v18 = vld [vmem:[%s0 + $0x18] sm:$0xf]
    %v19 = vld [vmem:[%s0 + $0x1c] sm:$0xf]
    %v20 = vld [vmem:[%s0 + $0x20] sm:$0xf]
    %v21 = vld [vmem:[%s0 + $0x24] sm:$0xf]
    %v22 = vld [vmem:[%s0 + $0x28] sm:$0xf]
    %v23 = vld [vmem:[%s0 + $0x2c] sm:$0xf]
    %v24 = vld [vmem:[%s0 + $0x30] sm:$0xf]
    %v25 = vld [vmem:[%s0 + $0x34] sm:$0xf]
    %v26 = vld [vmem:[%s0 + $0x38] sm:$0xf]
    %v27 = vld [vmem:[%s0 + $0x3c] sm:$0xf]
    %v28 = vld [vmem:[%s0 + $0x40] sm:$0xf]
    %v29 = vld [vmem:[%s0 + $0x44] sm:$0xf]
    %v30 = vld [vmem:[%s0 + $0x48] sm:$0xf]
    %v31 = vld [vmem:[%s0 + $0x4c] sm:$0xf]
    %v32 = vld [vmem:[%s0 + $0x50] sm:$0xf]
    %v33 = vld [vmem:[%s0 + $0x54] sm:$0xf]
    %v34 = vld [vmem:[%s0 + $0x58] sm:$0xf]
    %v35 = vld [vmem:[%s0 + $0x5c] sm:$0xf]
    %v36 = vld [vmem:[%s0 + $0x60] sm:$0xf]
    %v37 = vld [vmem:[%s0 + $0x64] sm:$0xf]
    %v38 = vld [vmem:[%s0 + $0x68] sm:$0xf]
    %v39 = vld [vmem:[%s0 + $0x6c] sm:$0xf]
    %v40 = vld [vmem:[%s0 + $0x70] sm:$0xf]
    %v41 = vld [vmem:[%s0 + $0x74] sm:$0xf]
    %v42 = vld [vmem:[%s0 + $0x78] sm:$0xf]
    %v43 = vld [vmem:[%s0 + $0x7c] sm:$0xf]
    %v44 = vunpack.c.l.bf16 %v12
    %v45 = vunpack.c.l.bf16 %v13
    %v46 = vunpack.c.l.bf16 %v14
    %v47 = vunpack.c.l.bf16 %v15
    %v48 = vunpack.c.l.bf16 %v16
    %v49 = vunpack.c.l.bf16 %v17
    %v50 = vunpack.c.l.bf16 %v18
    %v51 = vunpack.c.l.bf16 %v19
    %v52 = vunpack.c.l.bf16 %v20
    %v53 = vunpack.c.l.bf16 %v21
    %v54 = vunpack.c.l.bf16 %v22
    %v55 = vunpack.c.l.bf16 %v23
    %v56 = vunpack.c.l.bf16 %v24
    %v57 = vunpack.c.l.bf16 %v25
    %v58 = vunpack.c.l.bf16 %v26
    %v59 = vunpack.c.l.bf16 %v27
    %v60 = vunpack.c.l.bf16 %v28
    %v61 = vunpack.c.l.bf16 %v29
    %v62 = vunpack.c.l.bf16 %v30
    %v63 = vunpack.c.l.bf16 %v31
    %v64 = vunpack.c.l.bf16 %v32
    %v65 = vunpack.c.l.bf16 %v33
    %v66 = vunpack.c.l.bf16 %v34
    %v67 = vunpack.c.l.bf16 %v35
    %v68 = vunpack.c.l.bf16 %v36
    %v69 = vunpack.c.l.bf16 %v37
    %v70 = vunpack.c.l.bf16 %v38
    %v71 = vunpack.c.l.bf16 %v39
    %v72 = vunpack.c.l.bf16 %v40
    %v73 = vunpack.c.l.bf16 %v41
    %v74 = vunpack.c.l.bf16 %v42
    %v75 = vunpack.c.l.bf16 %v43
    %v76 = vld [vmem:[%s1] sm:$0x1]
    %v78 = vlaneseq
    %v79 = vshrl.u32 %v78, 7
    %v80 = vsub.s32 0, %v79
    %v81 = vrot.slane %v76, %v80
    %82 = vset.pattern.permute.xlu0 0
    %83 = vperm.xlu0 %82, %v81
    %v84 = vpop.permute.xlu0 %83
    %v86 = vmul.f32 %v44, %v84
    %v87 = vmul.f32 %v45, %v84
    %v88 = vmul.f32 %v46, %v84
    %v89 = vmul.f32 %v47, %v84
    %v90 = vmul.f32 %v48, %v84
    %v91 = vmul.f32 %v49, %v84
    %v92 = vmul.f32 %v50, %v84
    %v93 = vmul.f32 %v51, %v84
    %v94 = vmul.f32 %v52, %v84
    %v95 = vmul.f32 %v53, %v84
    %v96 = vmul.f32 %v54, %v84
    %v97 = vmul.f32 %v55, %v84
    %v98 = vmul.f32 %v56, %v84
    %v99 = vmul.f32 %v57, %v84
    %v100 = vmul.f32 %v58, %v84
    %v101 = vmul.f32 %v59, %v84
    %v102 = vmul.f32 %v60, %v84
    %v103 = vmul.f32 %v61, %v84
    %v104 = vmul.f32 %v62, %v84
    %v105 = vmul.f32 %v63, %v84
    %v106 = vmul.f32 %v64, %v84
    %v107 = vmul.f32 %v65, %v84
    %v108 = vmul.f32 %v66, %v84
    %v109 = vmul.f32 %v67, %v84
    %v110 = vmul.f32 %v68, %v84
    %v111 = vmul.f32 %v69, %v84
    %v112 = vmul.f32 %v70, %v84
    %v113 = vmul.f32 %v71, %v84
    %v114 = vmul.f32 %v72, %v84
    %v115 = vmul.f32 %v73, %v84
    %v116 = vmul.f32 %v74, %v84
    %v117 = vmul.f32 %v75, %v84
    %s118 = scalar_lea.vmem %s0, 128
    %v119 = vld [vmem:[%s118] sm:$0xf]
    %v120 = vld [vmem:[%s118 + $0x4] sm:$0xf]
    %v121 = vld [vmem:[%s118 + $0x8] sm:$0xf]
    %v122 = vld [vmem:[%s118 + $0xc] sm:$0xf]
    %v123 = vld [vmem:[%s118 + $0x10] sm:$0xf]
    %v124 = vld [vmem:[%s118 + $0x14] sm:$0xf]
    %v125 = vld [vmem:[%s118 + $0x18] sm:$0xf]
    %v126 = vld [vmem:[%s118 + $0x1c] sm:$0xf]
    %v127 = vld [vmem:[%s118 + $0x20] sm:$0xf]
    %v128 = vld [vmem:[%s118 + $0x24] sm:$0xf]
    %v129 = vld [vmem:[%s118 + $0x28] sm:$0xf]
    %v130 = vld [vmem:[%s118 + $0x2c] sm:$0xf]
    %v131 = vld [vmem:[%s118 + $0x30] sm:$0xf]
    %v132 = vld [vmem:[%s118 + $0x34] sm:$0xf]
    %v133 = vld [vmem:[%s118 + $0x38] sm:$0xf]
    %v134 = vld [vmem:[%s118 + $0x3c] sm:$0xf]
    %v135 = vld [vmem:[%s118 + $0x40] sm:$0xf]
    %v136 = vld [vmem:[%s118 + $0x44] sm:$0xf]
    %v137 = vld [vmem:[%s118 + $0x48] sm:$0xf]
    %v138 = vld [vmem:[%s118 + $0x4c] sm:$0xf]
    %v139 = vld [vmem:[%s118 + $0x50] sm:$0xf]
    %v140 = vld [vmem:[%s118 + $0x54] sm:$0xf]
    %v141 = vld [vmem:[%s118 + $0x58] sm:$0xf]
    %v142 = vld [vmem:[%s118 + $0x5c] sm:$0xf]
    %v143 = vld [vmem:[%s118 + $0x60] sm:$0xf]
    %v144 = vld [vmem:[%s118 + $0x64] sm:$0xf]
    %v145 = vld [vmem:[%s118 + $0x68] sm:$0xf]
    %v146 = vld [vmem:[%s118 + $0x6c] sm:$0xf]
    %v147 = vld [vmem:[%s118 + $0x70] sm:$0xf]
    %v148 = vld [vmem:[%s118 + $0x74] sm:$0xf]
    %v149 = vld [vmem:[%s118 + $0x78] sm:$0xf]
    %v150 = vld [vmem:[%s118 + $0x7c] sm:$0xf]
    %v151 = vunpack.c.l.bf16 %v119
    %v152 = vunpack.c.l.bf16 %v120
    %v153 = vunpack.c.l.bf16 %v121
    %v154 = vunpack.c.l.bf16 %v122
    %v155 = vunpack.c.l.bf16 %v123
    %v156 = vunpack.c.l.bf16 %v124
    %v157 = vunpack.c.l.bf16 %v125
    %v158 = vunpack.c.l.bf16 %v126
    %v159 = vunpack.c.l.bf16 %v127
    %v160 = vunpack.c.l.bf16 %v128
    %v161 = vunpack.c.l.bf16 %v129
    %v162 = vunpack.c.l.bf16 %v130
    %v163 = vunpack.c.l.bf16 %v131
    %v164 = vunpack.c.l.bf16 %v132
    %v165 = vunpack.c.l.bf16 %v133
    %v166 = vunpack.c.l.bf16 %v134
    %v167 = vunpack.c.l.bf16 %v135
    %v168 = vunpack.c.l.bf16 %v136
    %v169 = vunpack.c.l.bf16 %v137
    %v170 = vunpack.c.l.bf16 %v138
    %v171 = vunpack.c.l.bf16 %v139
    %v172 = vunpack.c.l.bf16 %v140
    %v173 = vunpack.c.l.bf16 %v141
    %v174 = vunpack.c.l.bf16 %v142
    %v175 = vunpack.c.l.bf16 %v143
    %v176 = vunpack.c.l.bf16 %v144
    %v177 = vunpack.c.l.bf16 %v145
    %v178 = vunpack.c.l.bf16 %v146
    %v179 = vunpack.c.l.bf16 %v147
    %v180 = vunpack.c.l.bf16 %v148
    %v181 = vunpack.c.l.bf16 %v149
    %v182 = vunpack.c.l.bf16 %v150
    %s183 = scalar_lea.vmem %s1, 1
    %v184 = vld [vmem:[%s183] sm:$0x1]
    %v186 = vlaneseq
    %v187 = vshrl.u32 %v186, 7
    %v188 = vsub.s32 0, %v187
    %v189 = vrot.slane %v184, %v188
    %190 = vset.pattern.permute.xlu0 0
    %191 = vperm.xlu0 %190, %v189
    %v192 = vpop.permute.xlu0 %191
    %v194 = vmul.f32 %v151, %v192
    %v195 = vmul.f32 %v152, %v192
    %v196 = vmul.f32 %v153, %v192
    %v197 = vmul.f32 %v154, %v192
    %v198 = vmul.f32 %v155, %v192
    %v199 = vmul.f32 %v156, %v192
    %v200 = vmul.f32 %v157, %v192
    %v201 = vmul.f32 %v158, %v192
    %v202 = vmul.f32 %v159, %v192
    %v203 = vmul.f32 %v160, %v192
    %v204 = vmul.f32 %v161, %v192
    %v205 = vmul.f32 %v162, %v192
    %v206 = vmul.f32 %v163, %v192
    %v207 = vmul.f32 %v164, %v192
    %v208 = vmul.f32 %v165, %v192
    %v209 = vmul.f32 %v166, %v192
    %v210 = vmul.f32 %v167, %v192
    %v211 = vmul.f32 %v168, %v192
    %v212 = vmul.f32 %v169, %v192
    %v213 = vmul.f32 %v170, %v192
    %v214 = vmul.f32 %v171, %v192
    %v215 = vmul.f32 %v172, %v192
    %v216 = vmul.f32 %v173, %v192
    %v217 = vmul.f32 %v174, %v192
    %v218 = vmul.f32 %v175, %v192
    %v219 = vmul.f32 %v176, %v192
    %v220 = vmul.f32 %v177, %v192
    %v221 = vmul.f32 %v178, %v192
    %v222 = vmul.f32 %v179, %v192
    %v223 = vmul.f32 %v180, %v192
    %v224 = vmul.f32 %v181, %v192
    %v225 = vmul.f32 %v182, %v192
    %v226 = vadd.f32 %v86, %v194
    %v227 = vadd.f32 %v87, %v195
    %v228 = vadd.f32 %v88, %v196
    %v229 = vadd.f32 %v89, %v197
    %v230 = vadd.f32 %v90, %v198
    %v231 = vadd.f32 %v91, %v199
    %v232 = vadd.f32 %v92, %v200
    %v233 = vadd.f32 %v93, %v201
    %v234 = vadd.f32 %v94, %v202
    %v235 = vadd.f32 %v95, %v203
    %v236 = vadd.f32 %v96, %v204
    %v237 = vadd.f32 %v97, %v205
    %v238 = vadd.f32 %v98, %v206
    %v239 = vadd.f32 %v99, %v207
    %v240 = vadd.f32 %v100, %v208
    %v241 = vadd.f32 %v101, %v209
    %v242 = vadd.f32 %v102, %v210
    %v243 = vadd.f32 %v103, %v211
    %v244 = vadd.f32 %v104, %v212
    %v245 = vadd.f32 %v105, %v213
    %v246 = vadd.f32 %v106, %v214
    %v247 = vadd.f32 %v107, %v215
    %v248 = vadd.f32 %v108, %v216
    %v249 = vadd.f32 %v109, %v217
    %v250 = vadd.f32 %v110, %v218
    %v251 = vadd.f32 %v111, %v219
    %v252 = vadd.f32 %v112, %v220
    %v253 = vadd.f32 %v113, %v221
    %v254 = vadd.f32 %v114, %v222
    %v255 = vadd.f32 %v115, %v223
    %v256 = vadd.f32 %v116, %v224
    %v257 = vadd.f32 %v117, %v225
    %s258 = scalar_lea.vmem %s0, 256
    %v259 = vld [vmem:[%s258] sm:$0xf]
    %v260 = vld [vmem:[%s258 + $0x4] sm:$0xf]
    %v261 = vld [vmem:[%s258 + $0x8] sm:$0xf]
    %v262 = vld [vmem:[%s258 + $0xc] sm:$0xf]
    %v263 = vld [vmem:[%s258 + $0x10] sm:$0xf]
    %v264 = vld [vmem:[%s258 + $0x14] sm:$0xf]
    %v265 = vld [vmem:[%s258 + $0x18] sm:$0xf]
    %v266 = vld [vmem:[%s258 + $0x1c] sm:$0xf]
    %v267 = vld [vmem:[%s258 + $0x20] sm:$0xf]
    %v268 = vld [vmem:[%s258 + $0x24] sm:$0xf]
    %v269 = vld [vmem:[%s258 + $0x28] sm:$0xf]
    %v270 = vld [vmem:[%s258 + $0x2c] sm:$0xf]
    %v271 = vld [vmem:[%s258 + $0x30] sm:$0xf]
    %v272 = vld [vmem:[%s258 + $0x34] sm:$0xf]
    %v273 = vld [vmem:[%s258 + $0x38] sm:$0xf]
    %v274 = vld [vmem:[%s258 + $0x3c] sm:$0xf]
    %v275 = vld [vmem:[%s258 + $0x40] sm:$0xf]
    %v276 = vld [vmem:[%s258 + $0x44] sm:$0xf]
    %v277 = vld [vmem:[%s258 + $0x48] sm:$0xf]
    %v278 = vld [vmem:[%s258 + $0x4c] sm:$0xf]
    %v279 = vld [vmem:[%s258 + $0x50] sm:$0xf]
    %v280 = vld [vmem:[%s258 + $0x54] sm:$0xf]
    %v281 = vld [vmem:[%s258 + $0x58] sm:$0xf]
    %v282 = vld [vmem:[%s258 + $0x5c] sm:$0xf]
    %v283 = vld [vmem:[%s258 + $0x60] sm:$0xf]
    %v284 = vld [vmem:[%s258 + $0x64] sm:$0xf]
    %v285 = vld [vmem:[%s258 + $0x68] sm:$0xf]
    %v286 = vld [vmem:[%s258 + $0x6c] sm:$0xf]
    %v287 = vld [vmem:[%s258 + $0x70] sm:$0xf]
    %v288 = vld [vmem:[%s258 + $0x74] sm:$0xf]
    %v289 = vld [vmem:[%s258 + $0x78] sm:$0xf]
    %v290 = vld [vmem:[%s258 + $0x7c] sm:$0xf]
    %v291 = vunpack.c.l.bf16 %v259
    %v292 = vunpack.c.l.bf16 %v260
    %v293 = vunpack.c.l.bf16 %v261
    %v294 = vunpack.c.l.bf16 %v262
    %v295 = vunpack.c.l.bf16 %v263
    %v296 = vunpack.c.l.bf16 %v264
    %v297 = vunpack.c.l.bf16 %v265
    %v298 = vunpack.c.l.bf16 %v266
    %v299 = vunpack.c.l.bf16 %v267
    %v300 = vunpack.c.l.bf16 %v268
    %v301 = vunpack.c.l.bf16 %v269
    %v302 = vunpack.c.l.bf16 %v270
    %v303 = vunpack.c.l.bf16 %v271
    %v304 = vunpack.c.l.bf16 %v272
    %v305 = vunpack.c.l.bf16 %v273
    %v306 = vunpack.c.l.bf16 %v274
    %v307 = vunpack.c.l.bf16 %v275
    %v308 = vunpack.c.l.bf16 %v276
    %v309 = vunpack.c.l.bf16 %v277
    %v310 = vunpack.c.l.bf16 %v278
    %v311 = vunpack.c.l.bf16 %v279
    %v312 = vunpack.c.l.bf16 %v280
    %v313 = vunpack.c.l.bf16 %v281
    %v314 = vunpack.c.l.bf16 %v282
    %v315 = vunpack.c.l.bf16 %v283
    %v316 = vunpack.c.l.bf16 %v284
    %v317 = vunpack.c.l.bf16 %v285
    %v318 = vunpack.c.l.bf16 %v286
    %v319 = vunpack.c.l.bf16 %v287
    %v320 = vunpack.c.l.bf16 %v288
    %v321 = vunpack.c.l.bf16 %v289
    %v322 = vunpack.c.l.bf16 %v290
    %s323 = scalar_lea.vmem %s1, 2
    %v324 = vld [vmem:[%s323] sm:$0x1]
    %v326 = vlaneseq
    %v327 = vshrl.u32 %v326, 7
    %v328 = vsub.s32 0, %v327
    %v329 = vrot.slane %v324, %v328
    %330 = vset.pattern.permute.xlu0 0
    %331 = vperm.xlu0 %330, %v329
    %v332 = vpop.permute.xlu0 %331
    %v334 = vmul.f32 %v291, %v332
    %v335 = vmul.f32 %v292, %v332
    %v336 = vmul.f32 %v293, %v332
    %v337 = vmul.f32 %v294, %v332
    %v338 = vmul.f32 %v295, %v332
    %v339 = vmul.f32 %v296, %v332
    %v340 = vmul.f32 %v297, %v332
    %v341 = vmul.f32 %v298, %v332
    %v342 = vmul.f32 %v299, %v332
    %v343 = vmul.f32 %v300, %v332
    %v344 = vmul.f32 %v301, %v332
    %v345 = vmul.f32 %v302, %v332
    %v346 = vmul.f32 %v303, %v332
    %v347 = vmul.f32 %v304, %v332
    %v348 = vmul.f32 %v305, %v332
    %v349 = vmul.f32 %v306, %v332
    %v350 = vmul.f32 %v307, %v332
    %v351 = vmul.f32 %v308, %v332
    %v352 = vmul.f32 %v309, %v332
    %v353 = vmul.f32 %v310, %v332
    %v354 = vmul.f32 %v311, %v332
    %v355 = vmul.f32 %v312, %v332
    %v356 = vmul.f32 %v313, %v332
    %v357 = vmul.f32 %v314, %v332
    %v358 = vmul.f32 %v315, %v332
    %v359 = vmul.f32 %v316, %v332
    %v360 = vmul.f32 %v317, %v332
    %v361 = vmul.f32 %v318, %v332
    %v362 = vmul.f32 %v319, %v332
    %v363 = vmul.f32 %v320, %v332
    %v364 = vmul.f32 %v321, %v332
    %v365 = vmul.f32 %v322, %v332
    %v366 = vadd.f32 %v226, %v334
    %v367 = vadd.f32 %v227, %v335
    %v368 = vadd.f32 %v228, %v336
    %v369 = vadd.f32 %v229, %v337
    %v370 = vadd.f32 %v230, %v338
    %v371 = vadd.f32 %v231, %v339
    %v372 = vadd.f32 %v232, %v340
    %v373 = vadd.f32 %v233, %v341
    %v374 = vadd.f32 %v234, %v342
    %v375 = vadd.f32 %v235, %v343
    %v376 = vadd.f32 %v236, %v344
    %v377 = vadd.f32 %v237, %v345
    %v378 = vadd.f32 %v238, %v346
    %v379 = vadd.f32 %v239, %v347
    %v380 = vadd.f32 %v240, %v348
    %v381 = vadd.f32 %v241, %v349
    %v382 = vadd.f32 %v242, %v350
    %v383 = vadd.f32 %v243, %v351
    %v384 = vadd.f32 %v244, %v352
    %v385 = vadd.f32 %v245, %v353
    %v386 = vadd.f32 %v246, %v354
    %v387 = vadd.f32 %v247, %v355
    %v388 = vadd.f32 %v248, %v356
    %v389 = vadd.f32 %v249, %v357
    %v390 = vadd.f32 %v250, %v358
    %v391 = vadd.f32 %v251, %v359
    %v392 = vadd.f32 %v252, %v360
    %v393 = vadd.f32 %v253, %v361
    %v394 = vadd.f32 %v254, %v362
    %v395 = vadd.f32 %v255, %v363
    %v396 = vadd.f32 %v256, %v364
    %v397 = vadd.f32 %v257, %v365
    %398 = vst [vmem:[#allocation2] sm:$0xff] %v366
    %399 = vst [vmem:[#allocation2 + $0x8] sm:$0xff] %v367
    %400 = vst [vmem:[#allocation2 + $0x10] sm:$0xff] %v368
    %401 = vst [vmem:[#allocation2 + $0x18] sm:$0xff] %v369
    %402 = vst [vmem:[#allocation2 + $0x20] sm:$0xff] %v370
    %403 = vst [vmem:[#allocation2 + $0x28] sm:$0xff] %v371
    %404 = vst [vmem:[#allocation2 + $0x30] sm:$0xff] %v372
    %405 = vst [vmem:[#allocation2 + $0x38] sm:$0xff] %v373
    %406 = vst [vmem:[#allocation2 + $0x40] sm:$0xff] %v374
    %407 = vst [vmem:[#allocation2 + $0x48] sm:$0xff] %v375
    %408 = vst [vmem:[#allocation2 + $0x50] sm:$0xff] %v376
    %409 = vst [vmem:[#allocation2 + $0x58] sm:$0xff] %v377
    %410 = vst [vmem:[#allocation2 + $0x60] sm:$0xff] %v378
    %411 = vst [vmem:[#allocation2 + $0x68] sm:$0xff] %v379
    %412 = vst [vmem:[#allocation2 + $0x70] sm:$0xff] %v380
    %413 = vst [vmem:[#allocation2 + $0x78] sm:$0xff] %v381
    %414 = vst [vmem:[#allocation2 + $0x80] sm:$0xff] %v382
    %415 = vst [vmem:[#allocation2 + $0x88] sm:$0xff] %v383
    %416 = vst [vmem:[#allocation2 + $0x90] sm:$0xff] %v384
    %417 = vst [vmem:[#allocation2 + $0x98] sm:$0xff] %v385
    %418 = vst [vmem:[#allocation2 + $0xa0] sm:$0xff] %v386
    %419 = vst [vmem:[#allocation2 + $0xa8] sm:$0xff] %v387
    %420 = vst [vmem:[#allocation2 + $0xb0] sm:$0xff] %v388
    %421 = vst [vmem:[#allocation2 + $0xb8] sm:$0xff] %v389
    %422 = vst [vmem:[#allocation2 + $0xc0] sm:$0xff] %v390
    %423 = vst [vmem:[#allocation2 + $0xc8] sm:$0xff] %v391
    %424 = vst [vmem:[#allocation2 + $0xd0] sm:$0xff] %v392
    %425 = vst [vmem:[#allocation2 + $0xd8] sm:$0xff] %v393
    %426 = vst [vmem:[#allocation2 + $0xe0] sm:$0xff] %v394
    %427 = vst [vmem:[#allocation2 + $0xe8] sm:$0xff] %v395
    %428 = vst [vmem:[#allocation2 + $0xf0] sm:$0xff] %v396
    %429 = vst [vmem:[#allocation2 + $0xf8] sm:$0xff] %v397
    // Predicated region
    $region10: #{mp_encoder_forward.5} parent=1 // pred_check
      _
    $region11: #{mp_encoder_forward.5} parent=1 // pred_check_branch
      %431 = sbr.rel (0) target = $region13
    $region12: #{mp_encoder_forward.5} parent=1 // pred_region
      %s433 = ssub.s32 4096, 4096
      %434 = vsyncadd [#allocation3], %s433
      %s435 = sshll.u32 [#allocation2], 4
      %s436 = int_to_ptr.vmem [resolvable:$true] %s435
      %441 = dma.vmem_to_hbm [thread:$0]  %s436, 4096, %s2, [#allocation3], 128, 128, 8
    $region13: #{mp_encoder_forward.5} parent=1 // pred_fallthru
      _
    // Predicated region
    $region14: #{mp_encoder_forward.5} parent=1 // pred_check
      _
    $region15: #{mp_encoder_forward.5} parent=1 // pred_check_branch
      %443 = sbr.rel (0) target = $region17
    $region16: #{mp_encoder_forward.5} parent=1 // pred_region
      %444 = dma.done [#allocation3], 4096
    $region17: #{mp_encoder_forward.5} parent=1 // pred_fallthru
      _
    %445 = vsyncpa [#allocation3], 1

// kernel: mp_encoder_forward.4
$region0: #{mp_encoder_forward.4}
  #allocation0 [shape = 'u32[]', space=smem, size = 0x4, offset = 0x4, fixed_abs, tag = 'smem constant byte address 0x4 - core index']
  #allocation1 [shape = 'u32[144,128]{1,0:T(1,128)}', space=vmem, size = 0x12000, scoped, tag = 'internal scratch']
  #allocation2 [shape = 'bf16[256,128]{1,0:T(16,128)(2,1)}', space=vmem, size = 0x10000, scoped, tag = 'scratch operand']
  %s0 = inlined_call_operand.vmem [shape: bf16[256,128], index: 0, kind: input, shape index: {}]
  %s1 = inlined_call_operand.vmem [shape: bf16[3,128,128], index: 1, kind: input, shape index: {}]
  %s2 = inlined_call_operand.vmem [shape: bf16[3,256,256], index: 2, kind: input, shape index: {}]
  %s3 = inlined_call_operand.vmem [shape: f32[3,1,128], index: 3, kind: input, shape index: {}]
  %s4 = inlined_call_operand.vmem [shape: f32[3,1,128], index: 4, kind: input, shape index: {}]
  %s5 = inlined_call_operand.vmem [shape: bf16[128,128], index: 5, kind: input, shape index: {}]
  %s6 = inlined_call_operand.vmem [shape: f32[1,128], index: 6, kind: input, shape index: {}]
  %s7 = inlined_call_operand.vmem [shape: bf16[3,256,128], index: 7, kind: output, shape index: {0}]
  %s8 = inlined_call_operand.vmem [shape: f32[3,1,128], index: 8, kind: output, shape index: {1}]
  %9 = xla_tuple %s7, %s8
  %s10 = sld [smem:[#allocation0]]
  $region73: #{mp_encoder_forward.4} parent=0
    _
  %s12 = ssub.s32 1, %s10
  %s13 = scalar_select 0, %s12, %s10
  loop: start=0, step=1, limit=5
  $region2: #{mp_encoder_forward.4} parent=0 // loop_pre_header
    _
  $region3: #{mp_encoder_forward.4} parent=0 // loop_header
    %s15 = sphi 0, %s19
    %p16 = scmp.ge.s32.totalorder %s15, 5
    %s22 = sphi 0, %s34
    %s23 = sphi 0, %s30
    %s24 = sphi 0, %s22
    %s25 = sphi 0, %s23
    %s26 = sphi 0, %s24
    %s27 = sphi 0, %s25
    %s35 = sphi 0, %s35
    %s37 = sphi 0, %s35
    %s38 = sphi 0, %s37
    %s52 = sphi 0, %s38
    %s58 = sphi 0, %s60
    %s61 = sphi 0, %s58
    %s62 = sphi 0, %s61
    %s78 = sphi 0, %s62
    %s86 = sphi 0, %s88
    %s89 = sphi 0, %s86
    %s90 = sphi 0, %s89
    %s106 = sphi 0, %s90
    %s112 = sphi 0, %s114
    %s115 = sphi 0, %s112
    %s116 = sphi 0, %s115
    %s132 = sphi 0, %s116
    %s138 = sphi 0, %s140
    %s141 = sphi 0, %s138
    %s142 = sphi 0, %s141
    %s158 = sphi 0, %s142
    %s162 = sphi 0, %s162
    %s164 = sphi 0, %s162
    %s165 = sphi 0, %s164
    %s179 = sphi 0, %s165
    %s183 = sphi 0, %s183
    %s185 = sphi 0, %s183
    %s186 = sphi 0, %s185
    %s200 = sphi 0, %s186
    %s208 = sphi 0, %s210
    %s211 = sphi 0, %s208
    %s212 = sphi 0, %s211
    %s228 = sphi 0, %s212
    %s234 = sphi 0, %s236
    %s237 = sphi 0, %s234
    %s238 = sphi 0, %s237
    %s254 = sphi 0, %s238
  $region4: #{mp_encoder_forward.4} parent=0 // loop_header_branch
    %18 = sbr.rel (%p16) target = $region8
  $region5: #{mp_encoder_forward.4} parent=0 // loop_body
    %s20 = ssub.s32 %s15, 1
    %s21 = ssub.s32 %s15, 2
    %s28 = sadd.s32 1, %s23
    %p29 = scmp.ge.s32.totalorder %s28, 1
    %s30 = scalar_select %p29, 0, %s28
    %s31 = sadd.s32 1, %s22
    %s32 = scalar_select %p29, %s31, %s22
    %p33 = scmp.ge.s32.totalorder %s32, 3
    %s34 = scalar_select %p33, 0, %s32
    %s36 = sadd.s32 %s35, 1
    %p39 = scmp.eq.s32.totalorder %s15, 2
    %p40 = scmp.ne.s32.totalorder %s35, %s37
    %p41 = scmp.eq.s32.totalorder %s15, 0
    %p42 = por %p40, %p41
    %p43 = scmp.ne.s32.totalorder %s35, %s37
    %p44 = scmp.eq.s32.totalorder %s20, 2
    %p45 = por %p43, %p44
    %p46 = scmp.ne.s32.totalorder %s37, %s38
    %p47 = scmp.eq.s32.totalorder %s20, 0
    %p48 = por %p46, %p47
    %p49 = scmp.ne.s32.totalorder %s37, %s38
    %p50 = scmp.eq.s32.totalorder %s21, 2
    %p51 = por %p49, %p50
    %p53 = scmp.ne.s32.totalorder %s38, %s52
    %p54 = scmp.eq.s32.totalorder %s21, 0
    %p55 = por %p53, %p54
    %s56 = ssub.s32 %s22, %s34
    %p57 = scmp.eq.s32.totalorder %s56, 0
    %s59 = sadd.s32 %s58, 1
    %s60 = scalar_select %p57, %s58, %s59
    %p63 = pneg %p57
    %p64 = scmp.eq.s32.totalorder %s15, 2
    %p65 = por %p63, %p64
    %p66 = scmp.ne.s32.totalorder %s58, %s61
    %p67 = scmp.eq.s32.totalorder %s15, 0
    %p68 = por %p66, %p67
    %p69 = scmp.ne.s32.totalorder %s58, %s61
    %p70 = scmp.eq.s32.totalorder %s20, 2
    %p71 = por %p69, %p70
    %p72 = scmp.ne.s32.totalorder %s61, %s62
    %p73 = scmp.eq.s32.totalorder %s20, 0
    %p74 = por %p72, %p73
    %p75 = scmp.ne.s32.totalorder %s61, %s62
    %p76 = scmp.eq.s32.totalorder %s21, 2
    %p77 = por %p75, %p76
    %p79 = scmp.ne.s32.totalorder %s62, %s78
    %p80 = scmp.eq.s32.totalorder %s21, 0
    %p81 = por %p79, %p80
    %s82 = ssub.s32 %s22, %s34
    %s83 = ssub.s32 %s23, %s30
    %s84 = sor.u32 %s82, %s83
    %p85 = scmp.eq.s32.totalorder %s84, 0
    %s87 = sadd.s32 %s86, 1
    %s88 = scalar_select %p85, %s86, %s87
    %p91 = pneg %p85
    %p92 = scmp.eq.s32.totalorder %s15, 2
    %p93 = por %p91, %p92
    %p94 = scmp.ne.s32.totalorder %s86, %s89
    %p95 = scmp.eq.s32.totalorder %s15, 0
    %p96 = por %p94, %p95
    %p97 = scmp.ne.s32.totalorder %s86, %s89
    %p98 = scmp.eq.s32.totalorder %s20, 2
    %p99 = por %p97, %p98
    %p100 = scmp.ne.s32.totalorder %s89, %s90
    %p101 = scmp.eq.s32.totalorder %s20, 0
    %p102 = por %p100, %p101
    %p103 = scmp.ne.s32.totalorder %s89, %s90
    %p104 = scmp.eq.s32.totalorder %s21, 2
    %p105 = por %p103, %p104
    %p107 = scmp.ne.s32.totalorder %s90, %s106
    %p108 = scmp.eq.s32.totalorder %s21, 0
    %p109 = por %p107, %p108
    %s110 = ssub.s32 %s22, %s34
    %p111 = scmp.eq.s32.totalorder %s110, 0
    %s113 = sadd.s32 %s112, 1
    %s114 = scalar_select %p111, %s112, %s113
    %p117 = pneg %p111
    %p118 = scmp.eq.s32.totalorder %s15, 2
    %p119 = por %p117, %p118
    %p120 = scmp.ne.s32.totalorder %s112, %s115
    %p121 = scmp.eq.s32.totalorder %s15, 0
    %p122 = por %p120, %p121
    %p123 = scmp.ne.s32.totalorder %s112, %s115
    %p124 = scmp.eq.s32.totalorder %s20, 2
    %p125 = por %p123, %p124
    %p126 = scmp.ne.s32.totalorder %s115, %s116
    %p127 = scmp.eq.s32.totalorder %s20, 0
    %p128 = por %p126, %p127
    %p129 = scmp.ne.s32.totalorder %s115, %s116
    %p130 = scmp.eq.s32.totalorder %s21, 2
    %p131 = por %p129, %p130
    %p133 = scmp.ne.s32.totalorder %s116, %s132
    %p134 = scmp.eq.s32.totalorder %s21, 0
    %p135 = por %p133, %p134
    %s136 = ssub.s32 %s22, %s34
    %p137 = scmp.eq.s32.totalorder %s136, 0
    %s139 = sadd.s32 %s138, 1
    %s140 = scalar_select %p137, %s138, %s139
    %p143 = pneg %p137
    %p144 = scmp.eq.s32.totalorder %s15, 2
    %p145 = por %p143, %p144
    %p146 = scmp.ne.s32.totalorder %s138, %s141
    %p147 = scmp.eq.s32.totalorder %s15, 0
    %p148 = por %p146, %p147
    %p149 = scmp.ne.s32.totalorder %s138, %s141
    %p150 = scmp.eq.s32.totalorder %s20, 2
    %p151 = por %p149, %p150
    %p152 = scmp.ne.s32.totalorder %s141, %s142
    %p153 = scmp.eq.s32.totalorder %s20, 0
    %p154 = por %p152, %p153
    %p155 = scmp.ne.s32.totalorder %s141, %s142
    %p156 = scmp.eq.s32.totalorder %s21, 2
    %p157 = por %p155, %p156
    %p159 = scmp.ne.s32.totalorder %s142, %s158
    %p160 = scmp.eq.s32.totalorder %s21, 0
    %p161 = por %p159, %p160
    %s163 = sadd.s32 %s162, 1
    %p166 = scmp.eq.s32.totalorder %s15, 2
    %p167 = scmp.ne.s32.totalorder %s162, %s164
    %p168 = scmp.eq.s32.totalorder %s15, 0
    %p169 = por %p167, %p168
    %p170 = scmp.ne.s32.totalorder %s162, %s164
    %p171 = scmp.eq.s32.totalorder %s20, 2
    %p172 = por %p170, %p171
    %p173 = scmp.ne.s32.totalorder %s164, %s165
    %p174 = scmp.eq.s32.totalorder %s20, 0
    %p175 = por %p173, %p174
    %p176 = scmp.ne.s32.totalorder %s164, %s165
    %p177 = scmp.eq.s32.totalorder %s21, 2
    %p178 = por %p176, %p177
    %p180 = scmp.ne.s32.totalorder %s165, %s179
    %p181 = scmp.eq.s32.totalorder %s21, 0
    %p182 = por %p180, %p181
    %s184 = sadd.s32 %s183, 1
    %p187 = scmp.eq.s32.totalorder %s15, 2
    %p188 = scmp.ne.s32.totalorder %s183, %s185
    %p189 = scmp.eq.s32.totalorder %s15, 0
    %p190 = por %p188, %p189
    %p191 = scmp.ne.s32.totalorder %s183, %s185
    %p192 = scmp.eq.s32.totalorder %s20, 2
    %p193 = por %p191, %p192
    %p194 = scmp.ne.s32.totalorder %s185, %s186
    %p195 = scmp.eq.s32.totalorder %s20, 0
    %p196 = por %p194, %p195
    %p197 = scmp.ne.s32.totalorder %s185, %s186
    %p198 = scmp.eq.s32.totalorder %s21, 2
    %p199 = por %p197, %p198
    %p201 = scmp.ne.s32.totalorder %s186, %s200
    %p202 = scmp.eq.s32.totalorder %s21, 0
    %p203 = por %p201, %p202
    %s204 = ssub.s32 %s22, %s34
    %s205 = ssub.s32 %s23, %s30
    %s206 = sor.u32 %s204, %s205
    %p207 = scmp.eq.s32.totalorder %s206, 0
    %s209 = sadd.s32 %s208, 1
    %s210 = scalar_select %p207, %s208, %s209
    %p213 = pneg %p207
    %p214 = scmp.eq.s32.totalorder %s15, 2
    %p215 = por %p213, %p214
    %p216 = scmp.ne.s32.totalorder %s208, %s211
    %p217 = scmp.eq.s32.totalorder %s15, 0
    %p218 = por %p216, %p217
    %p219 = scmp.ne.s32.totalorder %s208, %s211
    %p220 = scmp.eq.s32.totalorder %s20, 2
    %p221 = por %p219, %p220
    %p222 = scmp.ne.s32.totalorder %s211, %s212
    %p223 = scmp.eq.s32.totalorder %s20, 0
    %p224 = por %p222, %p223
    %p225 = scmp.ne.s32.totalorder %s211, %s212
    %p226 = scmp.eq.s32.totalorder %s21, 2
    %p227 = por %p225, %p226
    %p229 = scmp.ne.s32.totalorder %s212, %s228
    %p230 = scmp.eq.s32.totalorder %s21, 0
    %p231 = por %p229, %p230
    %s232 = ssub.s32 %s22, %s34
    %p233 = scmp.eq.s32.totalorder %s232, 0
    %s235 = sadd.s32 %s234, 1
    %s236 = scalar_select %p233, %s234, %s235
    %p239 = pneg %p233
    %p240 = scmp.eq.s32.totalorder %s15, 2
    %p241 = por %p239, %p240
    %p242 = scmp.ne.s32.totalorder %s234, %s237
    %p243 = scmp.eq.s32.totalorder %s15, 0
    %p244 = por %p242, %p243
    %p245 = scmp.ne.s32.totalorder %s234, %s237
    %p246 = scmp.eq.s32.totalorder %s20, 2
    %p247 = por %p245, %p246
    %p248 = scmp.ne.s32.totalorder %s237, %s238
    %p249 = scmp.eq.s32.totalorder %s20, 0
    %p250 = por %p248, %p249
    %p251 = scmp.ne.s32.totalorder %s237, %s238
    %p252 = scmp.eq.s32.totalorder %s21, 2
    %p253 = por %p251, %p252
    %p255 = scmp.ne.s32.totalorder %s238, %s254
    %p256 = scmp.eq.s32.totalorder %s21, 0
    %p257 = por %p255, %p256
    %p258 = scmp.le.s32.totalorder 1, %s15
    %p259 = scmp.lt.s32.totalorder %s15, 4
    %p260 = pnand %p258, %p259
    %p261 = pneg %p260
    // Predicated region
    $region9: #{mp_encoder_forward.4} parent=5 // pred_check
      _
    $region10: #{mp_encoder_forward.4} parent=5 // pred_check_branch
      %263 = sbr.rel (%p260) target = $region12
    $region11: #{mp_encoder_forward.4} parent=5 // pred_region
      %s264 = ssub.s32 %s15, 1
      // Predicated region
      $region13: #{mp_encoder_forward.4} parent=11 // pred_check
        %p265 = pneg %p48
      $region14: #{mp_encoder_forward.4} parent=11 // pred_check_branch
        %267 = sbr.rel (%p265) target = $region16
      $region15: #{mp_encoder_forward.4} parent=11 // pred_region
        _
      $region16: #{mp_encoder_forward.4} parent=11 // pred_fallthru
        _
      // Predicated region
      $region17: #{mp_encoder_forward.4} parent=11 // pred_check
        %p268 = pneg %p175
      $region18: #{mp_encoder_forward.4} parent=11 // pred_check_branch
        %270 = sbr.rel (%p268) target = $region20
      $region19: #{mp_encoder_forward.4} parent=11 // pred_region
        _
      $region20: #{mp_encoder_forward.4} parent=11 // pred_fallthru
        _
      // Predicated region
      $region21: #{mp_encoder_forward.4} parent=11 // pred_check
        %p271 = pneg %p196
      $region22: #{mp_encoder_forward.4} parent=11 // pred_check_branch
        %273 = sbr.rel (%p271) target = $region24
      $region23: #{mp_encoder_forward.4} parent=11 // pred_region
        _
      $region24: #{mp_encoder_forward.4} parent=11 // pred_fallthru
        _
    $region12: #{mp_encoder_forward.4} parent=5 // pred_fallthru
      _
    %p274 = scmp.lt.s32.totalorder %s15, 3
    // Predicated region
    $region25: #{mp_encoder_forward.4} parent=5 // pred_check
      %p275 = pneg %p274
    $region26: #{mp_encoder_forward.4} parent=5 // pred_check_branch
      %277 = sbr.rel (%p275) target = $region28
    $region27: #{mp_encoder_forward.4} parent=5 // pred_region
      // Predicated region
      $region29: #{mp_encoder_forward.4} parent=27 // pred_check
        %p278 = pneg %p68
      $region30: #{mp_encoder_forward.4} parent=27 // pred_check_branch
        %280 = sbr.rel (%p278) target = $region32
      $region31: #{mp_encoder_forward.4} parent=27 // pred_region
        %p281 = scmp.lt.s32.totalorder %s22, 2
        %s282 = scalar_select %p281, %s22, 2
        %s283 = smul.addr %s282, 16
        %s284 = smul.addr %s283, 4
        %s285 = scalar_lea.vmem %s1, %s284
      $region32: #{mp_encoder_forward.4} parent=27 // pred_fallthru
        _
      // Predicated region
      $region33: #{mp_encoder_forward.4} parent=27 // pred_check
        %p286 = pneg %p96
      $region34: #{mp_encoder_forward.4} parent=27 // pred_check_branch
        %288 = sbr.rel (%p286) target = $region36
      $region35: #{mp_encoder_forward.4} parent=27 // pred_region
        %s289 = smul.u32 32, %s23
        %p290 = scmp.lt.s32.totalorder %s22, 2
        %s291 = scalar_select %p290, %s22, 2
        %p292 = scmp.lt.s32.totalorder %s289, 31
        %s293 = scalar_select %p292, %s289, 31
        %s294 = smul.addr %s293, 2
        %s295 = smul.addr %s291, 64
        %s296 = sadd.s32 %s294, %s295
        %s297 = smul.addr %s296, 4
        %s298 = scalar_lea.vmem %s2, %s297
        %s299 = smul.u32 32, %s23
      $region36: #{mp_encoder_forward.4} parent=27 // pred_fallthru
        _
      // Predicated region
      $region37: #{mp_encoder_forward.4} parent=27 // pred_check
        %p300 = pneg %p122
      $region38: #{mp_encoder_forward.4} parent=27 // pred_check_branch
        %302 = sbr.rel (%p300) target = $region40
      $region39: #{mp_encoder_forward.4} parent=27 // pred_region
        %p303 = scmp.lt.s32.totalorder %s22, 2
        %s304 = scalar_select %p303, %s22, 2
        %s305 = scalar_lea.vmem %s3, %s304
      $region40: #{mp_encoder_forward.4} parent=27 // pred_fallthru
        _
      // Predicated region
      $region41: #{mp_encoder_forward.4} parent=27 // pred_check
        %p306 = pneg %p148
      $region42: #{mp_encoder_forward.4} parent=27 // pred_check_branch
        %308 = sbr.rel (%p306) target = $region44
      $region43: #{mp_encoder_forward.4} parent=27 // pred_region
        %p309 = scmp.lt.s32.totalorder %s22, 2
        %s310 = scalar_select %p309, %s22, 2
        %s311 = scalar_lea.vmem %s4, %s310
      $region44: #{mp_encoder_forward.4} parent=27 // pred_fallthru
        _
    $region28: #{mp_encoder_forward.4} parent=5 // pred_fallthru
      _
    %p312 = scmp.le.s32.totalorder 1, %s15
    %p313 = scmp.lt.s32.totalorder %s15, 4
    %p314 = pnand %p312, %p313
    %p315 = pneg %p314
    // Predicated region
    $region45: #{mp_encoder_forward.4} parent=5 // pred_check
      _
    $region46: #{mp_encoder_forward.4} parent=5 // pred_check_branch
      %317 = sbr.rel (%p314) target = $region48
    $region47: #{mp_encoder_forward.4} parent=5 // pred_region
      %s318 = ssub.s32 %s15, 1
      %p319 = pneg %p48
      %p320 = pneg %p45
      %p321 = scmp.lt.s32.totalorder %s24, 2
      %s322 = scalar_select %p321, %s24, 2
      %s323 = smul.addr %s322, 16
      %s324 = smul.addr %s323, 4
      %s325 = scalar_lea.vmem %s1, %s324
      %p326 = pneg %p74
      %p327 = pneg %p71
      %s328 = smul.u32 32, %s25
      %p329 = scmp.lt.s32.totalorder %s24, 2
      %s330 = scalar_select %p329, %s24, 2
      %p331 = scmp.lt.s32.totalorder %s328, 31
      %s332 = scalar_select %p331, %s328, 31
      %s333 = smul.addr %s332, 2
      %s334 = smul.addr %s330, 64
      %s335 = sadd.s32 %s333, %s334
      %s336 = smul.addr %s335, 4
      %s337 = scalar_lea.vmem %s2, %s336
      %p338 = pneg %p102
      %p339 = pneg %p99
      %p340 = scmp.lt.s32.totalorder %s24, 2
      %s341 = scalar_select %p340, %s24, 2
      %s342 = scalar_lea.vmem %s3, %s341
      %p343 = pneg %p128
      %p344 = pneg %p125
      %p345 = scmp.lt.s32.totalorder %s24, 2
      %s346 = scalar_select %p345, %s24, 2
      %s347 = scalar_lea.vmem %s4, %s346
      %p348 = pneg %p154
      %p349 = pneg %p151
      %p350 = pneg %p175
      %p351 = pneg %p172
      %p352 = pneg %p196
      %p353 = pneg %p193
      %p354 = pneg %p224
      %p355 = pneg %p221
      %s356 = smul.u32 32, %s25
      %p357 = scmp.lt.s32.totalorder %s24, 2
      %s358 = scalar_select %p357, %s24, 2
      %p359 = scmp.lt.s32.totalorder %s356, 31
      %s360 = scalar_select %p359, %s356, 31
      %s361 = smul.addr %s358, 32
      %s362 = sadd.s32 %s360, %s361
      %s363 = smul.addr %s362, 4
      %s364 = scalar_lea.vmem %s7, %s363
      %p365 = pneg %p250
      %p366 = pneg %p247
      %p367 = scmp.lt.s32.totalorder %s24, 2
      %s368 = scalar_select %p367, %s24, 2
      %s369 = scalar_lea.vmem %s8, %s368
      %p370 = scmp.lt.s32.totalorder %s24, 2
      %s371 = scalar_select %p370, %s24, 2
      %s372 = smul.addr %s371, 16
      %s373 = smul.addr %s372, 4
      %s374 = scalar_lea.vmem %s1, %s373
      %s375 = smul.u32 32, %s25
      %p376 = scmp.lt.s32.totalorder %s24, 2
      %s377 = scalar_select %p376, %s24, 2
      %p378 = scmp.lt.s32.totalorder %s375, 31
      %s379 = scalar_select %p378, %s375, 31
      %s380 = smul.addr %s379, 2
      %s381 = smul.addr %s377, 64
      %s382 = sadd.s32 %s380, %s381
      %s383 = smul.addr %s382, 4
      %s384 = scalar_lea.vmem %s2, %s383
      %s385 = smul.u32 32, %s25
      %p386 = scmp.lt.s32.totalorder %s24, 2
      %s387 = scalar_select %p386, %s24, 2
      %s388 = scalar_lea.vmem %s3, %s387
      %p389 = scmp.lt.s32.totalorder %s24, 2
      %s390 = scalar_select %p389, %s24, 2
      %s391 = scalar_lea.vmem %s4, %s390
      %s392 = smul.u32 32, %s25
      %p393 = scmp.lt.s32.totalorder %s24, 2
      %s394 = scalar_select %p393, %s24, 2
      %p395 = scmp.lt.s32.totalorder %s392, 31
      %s396 = scalar_select %p395, %s392, 31
      %s397 = smul.addr %s394, 32
      %s398 = sadd.s32 %s396, %s397
      %s399 = smul.addr %s398, 4
      %s400 = scalar_lea.vmem %s7, %s399
      %s401 = smul.u32 32, %s25
      %p402 = scmp.lt.s32.totalorder %s24, 2
      %s403 = scalar_select %p402, %s24, 2
      %s404 = scalar_lea.vmem %s8, %s403
      %p406 = scmp.eq.s32.totalorder %s25, 0
      // Predicated region
      $region49: #{mp_encoder_forward.4} parent=47 // pred_check
        %p407 = pneg %p406
      $region50: #{mp_encoder_forward.4} parent=47 // pred_check_branch
        %409 = sbr.rel (%p407) target = $region52
      $region51: #{mp_encoder_forward.4} parent=47 // pred_region
        %v410 = vld [vmem:[%s0] sm:$0xf]
        %v411 = vld [vmem:[%s0 + $0x4] sm:$0xf]
        %v412 = vld [vmem:[%s0 + $0x8] sm:$0xf]
        %v413 = vld [vmem:[%s0 + $0xc] sm:$0xf]
        %v414 = vld [vmem:[%s0 + $0x10] sm:$0xf]
        %v415 = vld [vmem:[%s0 + $0x14] sm:$0xf]
        %v416 = vld [vmem:[%s0 + $0x18] sm:$0xf]
        %v417 = vld [vmem:[%s0 + $0x1c] sm:$0xf]
        %v418 = vld [vmem:[%s0 + $0x20] sm:$0xf]
        %v419 = vld [vmem:[%s0 + $0x24] sm:$0xf]
        %v420 = vld [vmem:[%s0 + $0x28] sm:$0xf]
        %v421 = vld [vmem:[%s0 + $0x2c] sm:$0xf]
        %v422 = vld [vmem:[%s0 + $0x30] sm:$0xf]
        %v423 = vld [vmem:[%s0 + $0x34] sm:$0xf]
        %v424 = vld [vmem:[%s0 + $0x38] sm:$0xf]
        %v425 = vld [vmem:[%s0 + $0x3c] sm:$0xf]
        %v426 = vld [vmem:[%s0 + $0x40] sm:$0xf]
        %v427 = vld [vmem:[%s0 + $0x44] sm:$0xf]
        %v428 = vld [vmem:[%s0 + $0x48] sm:$0xf]
        %v429 = vld [vmem:[%s0 + $0x4c] sm:$0xf]
        %v430 = vld [vmem:[%s0 + $0x50] sm:$0xf]
        %v431 = vld [vmem:[%s0 + $0x54] sm:$0xf]
        %v432 = vld [vmem:[%s0 + $0x58] sm:$0xf]
        %v433 = vld [vmem:[%s0 + $0x5c] sm:$0xf]
        %v434 = vld [vmem:[%s0 + $0x60] sm:$0xf]
        %v435 = vld [vmem:[%s0 + $0x64] sm:$0xf]
        %v436 = vld [vmem:[%s0 + $0x68] sm:$0xf]
        %v437 = vld [vmem:[%s0 + $0x6c] sm:$0xf]
        %v438 = vld [vmem:[%s0 + $0x70] sm:$0xf]
        %v439 = vld [vmem:[%s0 + $0x74] sm:$0xf]
        %v440 = vld [vmem:[%s0 + $0x78] sm:$0xf]
        %v441 = vld [vmem:[%s0 + $0x7c] sm:$0xf]
        %v442 = vld [vmem:[%s374] sm:$0xf]
        %v443 = vld [vmem:[%s374 + $0x4] sm:$0xf]
        %v444 = vld [vmem:[%s374 + $0x8] sm:$0xf]
        %v445 = vld [vmem:[%s374 + $0xc] sm:$0xf]
        %v446 = vld [vmem:[%s374 + $0x10] sm:$0xf]
        %v447 = vld [vmem:[%s374 + $0x14] sm:$0xf]
        %v448 = vld [vmem:[%s374 + $0x18] sm:$0xf]
        %v449 = vld [vmem:[%s374 + $0x1c] sm:$0xf]
        %v450 = vld [vmem:[%s374 + $0x20] sm:$0xf]
        %v451 = vld [vmem:[%s374 + $0x24] sm:$0xf]
        %v452 = vld [vmem:[%s374 + $0x28] sm:$0xf]
        %v453 = vld [vmem:[%s374 + $0x2c] sm:$0xf]
        %v454 = vld [vmem:[%s374 + $0x30] sm:$0xf]
        %v455 = vld [vmem:[%s374 + $0x34] sm:$0xf]
        %v456 = vld [vmem:[%s374 + $0x38] sm:$0xf]
        %v457 = vld [vmem:[%s374 + $0x3c] sm:$0xf]
        %v490 = vunpack.c.l.b16 %v410
        %v491 = vunpack.c.l.b16 %v411
        %v492 = vunpack.c.l.b16 %v412
        %v493 = vunpack.c.l.b16 %v413
        %v494 = vunpack.c.l.b16 %v414
        %v495 = vunpack.c.l.b16 %v415
        %v496 = vunpack.c.l.b16 %v416
        %v497 = vunpack.c.l.b16 %v417
        %v498 = vunpack.c.l.b16 %v418
        %v499 = vunpack.c.l.b16 %v419
        %v500 = vunpack.c.l.b16 %v420
        %v501 = vunpack.c.l.b16 %v421
        %v502 = vunpack.c.l.b16 %v422
        %v503 = vunpack.c.l.b16 %v423
        %v504 = vunpack.c.l.b16 %v424
        %v505 = vunpack.c.l.b16 %v425
        %v506 = vunpack.c.l.b16 %v426
        %v507 = vunpack.c.l.b16 %v427
        %v508 = vunpack.c.l.b16 %v428
        %v509 = vunpack.c.l.b16 %v429
        %v510 = vunpack.c.l.b16 %v430
        %v511 = vunpack.c.l.b16 %v431
        %v512 = vunpack.c.l.b16 %v432
        %v513 = vunpack.c.l.b16 %v433
        %v514 = vunpack.c.l.b16 %v434
        %v515 = vunpack.c.l.b16 %v435
        %v516 = vunpack.c.l.b16 %v436
        %v517 = vunpack.c.l.b16 %v437
        %v518 = vunpack.c.l.b16 %v438
        %v519 = vunpack.c.l.b16 %v439
        %v520 = vunpack.c.l.b16 %v440
        %v521 = vunpack.c.l.b16 %v441
        %v522 = vpack.c.b16 %v491, %v490
        %v523 = vpack.c.b16 %v493, %v492
        %v524 = vpack.c.b16 %v495, %v494
        %v525 = vpack.c.b16 %v497, %v496
        %v526 = vpack.c.b16 %v499, %v498
        %v527 = vpack.c.b16 %v501, %v500
        %v528 = vpack.c.b16 %v503, %v502
        %v529 = vpack.c.b16 %v505, %v504
        %v530 = vpack.c.b16 %v507, %v506
        %v531 = vpack.c.b16 %v509, %v508
        %v532 = vpack.c.b16 %v511, %v510
        %v533 = vpack.c.b16 %v513, %v512
        %v534 = vpack.c.b16 %v515, %v514
        %v535 = vpack.c.b16 %v517, %v516
        %v536 = vpack.c.b16 %v519, %v518
        %v537 = vpack.c.b16 %v521, %v520
        %v570 = vunpack.c.l.b16 %v442
        %v571 = vunpack.c.l.b16 %v443
        %v572 = vunpack.c.l.b16 %v444
        %v573 = vunpack.c.l.b16 %v445
        %v574 = vunpack.c.l.b16 %v446
        %v575 = vunpack.c.l.b16 %v447
        %v576 = vunpack.c.l.b16 %v448
        %v577 = vunpack.c.l.b16 %v449
        %v578 = vunpack.c.l.b16 %v450
        %v579 = vunpack.c.l.b16 %v451
        %v580 = vunpack.c.l.b16 %v452
        %v581 = vunpack.c.l.b16 %v453
        %v582 = vunpack.c.l.b16 %v454
        %v583 = vunpack.c.l.b16 %v455
        %v584 = vunpack.c.l.b16 %v456
        %v585 = vunpack.c.l.b16 %v457
        %v586 = vpack.c.b16 %v571, %v570
        %v587 = vpack.c.b16 %v573, %v572
        %v588 = vpack.c.b16 %v575, %v574
        %v589 = vpack.c.b16 %v577, %v576
        %v590 = vpack.c.b16 %v579, %v578
        %v591 = vpack.c.b16 %v581, %v580
        %v592 = vpack.c.b16 %v583, %v582
        %v593 = vpack.c.b16 %v585, %v584
        %602 = vmatprep.subr.bf16.mxu0 0
        %603 = vmatpush1.bf16.msra.mxu0 %v586
        %604 = vmatprep.subr.bf16.mxu0 0
        %605 = vmatpush1.bf16.msra.mxu0 %v587
        %606 = vmatprep.subr.bf16.mxu0 0
        %607 = vmatpush1.bf16.msra.mxu0 %v588
        %608 = vmatprep.subr.bf16.mxu0 0
        %609 = vmatpush1.bf16.msra.mxu0 %v589
        %610 = vmatprep.subr.bf16.mxu0 0
        %611 = vmatpush1.bf16.msra.mxu0 %v590
        %612 = vmatprep.subr.bf16.mxu0 0
        %613 = vmatpush1.bf16.msra.mxu0 %v591
        %614 = vmatprep.subr.bf16.mxu0 0
        %615 = vmatpush1.bf16.msra.mxu0 %v592
        %616 = vmatprep.subr.bf16.mxu0 0
        %617 = vmatpush1.bf16.msra.mxu0 %v593
        %618 = vmatprep.subr.bf16.mxu0 0
        %619 = vmatpush1.bf16.msra.mxu0 0
        %620 = vmatprep.subr.bf16.mxu0 0
        %621 = vmatpush1.bf16.msra.mxu0 0
        %622 = vmatprep.subr.bf16.mxu0 0
        %623 = vmatpush1.bf16.msra.mxu0 0
        %624 = vmatprep.subr.bf16.mxu0 0
        %625 = vmatpush1.bf16.msra.mxu0 0
        %626 = vmatprep.subr.bf16.mxu0 0
        %627 = vmatpush1.bf16.msra.mxu0 0
        %628 = vmatprep.subr.bf16.mxu0 0
        %629 = vmatpush1.bf16.msra.mxu0 0
        %630 = vmatprep.subr.bf16.mxu0 0
        %631 = vmatpush1.bf16.msra.mxu0 0
        %632 = vmatprep.subr.bf16.mxu0 0
        %633 = vmatpush1.bf16.msra.mxu0 0
        %634 = vmatprep.mubr.bf16.mxu0 0
        %635 = vmatmul.mubr.bf16.gmra.mrb[0].mxu0 %v522
        %v636 = vpop.f32.mrb[0].mxu0
        %v637 = vadd.f32 0.0, %v636
        %v638 = vpop.f32.mrb[0].mxu0
        %v639 = vpop.f32.mrb[0].mxu0
        %v640 = vadd.f32 0.0, %v639
        %v641 = vpop.f32.mrb[0].mxu0
        %642 = vmatprep.mubr.bf16.mxu0 0
        %643 = vmatmul.mubr.bf16.gmra.mrb[0].mxu0 %v523
        %v644 = vpop.f32.mrb[0].mxu0
        %v645 = vadd.f32 0.0, %v644
        %v646 = vpop.f32.mrb[0].mxu0
        %v647 = vpop.f32.mrb[0].mxu0
        %v648 = vadd.f32 0.0, %v647
        %v649 = vpop.f32.mrb[0].mxu0
        %650 = vmatprep.mubr.bf16.mxu0 0
        %651 = vmatmul.mubr.bf16.gmra.mrb[0].mxu0 %v524
        %v652 = vpop.f32.mrb[0].mxu0
        %v653 = vadd.f32 0.0, %v652
        %v654 = vpop.f32.mrb[0].mxu0
        %v655 = vpop.f32.mrb[0].mxu0
        %v656 = vadd.f32 0.0, %v655
        %v657 = vpop.f32.mrb[0].mxu0
        %658 = vmatprep.mubr.bf16.mxu0 0
        %659 = vmatmul.mubr.bf16.gmra.mrb[0].mxu0 %v525
        %v660 = vpop.f32.mrb[0].mxu0
        %v661 = vadd.f32 0.0, %v660
        %v662 = vpop.f32.mrb[0].mxu0
        %v663 = vpop.f32.mrb[0].mxu0
        %v664 = vadd.f32 0.0, %v663
        %v665 = vpop.f32.mrb[0].mxu0
        %666 = vmatprep.mubr.bf16.mxu0 0
        %667 = vmatmul.mubr.bf16.gmra.mrb[0].mxu0 %v526
        %v668 = vpop.f32.mrb[0].mxu0
        %v669 = vadd.f32 0.0, %v668
        %v670 = vpop.f32.mrb[0].mxu0
        %v671 = vpop.f32.mrb[0].mxu0
        %v672 = vadd.f32 0.0, %v671
        %v673 = vpop.f32.mrb[0].mxu0
        %674 = vmatprep.mubr.bf16.mxu0 0
        %675 = vmatmul.mubr.bf16.gmra.mrb[0].mxu0 %v527
        %v676 = vpop.f32.mrb[0].mxu0
        %v677 = vadd.f32 0.0, %v676
        %v678 = vpop.f32.mrb[0].mxu0
        %v679 = vpop.f32.mrb[0].mxu0
        %v680 = vadd.f32 0.0, %v679
        %v681 = vpop.f32.mrb[0].mxu0
        %682 = vmatprep.mubr.bf16.mxu0 0
        %683 = vmatmul.mubr.bf16.gmra.mrb[0].mxu0 %v528
        %v684 = vpop.f32.mrb[0].mxu0
        %v685 = vadd.f32 0.0, %v684
        %v686 = vpop.f32.mrb[0].mxu0
        %v687 = vpop.f32.mrb[0].mxu0
        %v688 = vadd.f32 0.0, %v687
        %v689 = vpop.f32.mrb[0].mxu0
        %690 = vmatprep.mubr.bf16.mxu0 0
        %691 = vmatmul.mubr.bf16.gmra.mrb[0].mxu0 %v529
        %v692 = vpop.f32.mrb[0].mxu0
        %v693 = vadd.f32 0.0, %v692
        %v694 = vpop.f32.mrb[0].mxu0
        %v695 = vpop.f32.mrb[0].mxu0
        %v696 = vadd.f32 0.0, %v695
        %v697 = vpop.f32.mrb[0].mxu0
        %698 = vmatprep.mubr.bf16.mxu0 0
        %699 = vmatmul.mubr.bf16.gmra.mrb[0].mxu0 %v530
        %v700 = vpop.f32.mrb[0].mxu0
        %v701 = vadd.f32 0.0, %v700
        %v702 = vpop.f32.mrb[0].mxu0
        %v703 = vpop.f32.mrb[0].mxu0
        %v704 = vadd.f32 0.0, %v703
        %v705 = vpop.f32.mrb[0].mxu0
        %706 = vmatprep.mubr.bf16.mxu0 0
        %707 = vmatmul.mubr.bf16.gmra.mrb[0].mxu0 %v531
        %v708 = vpop.f32.mrb[0].mxu0
        %v709 = vadd.f32 0.0, %v708
        %v710 = vpop.f32.mrb[0].mxu0
        %v711 = vpop.f32.mrb[0].mxu0
        %v712 = vadd.f32 0.0, %v711
        %v713 = vpop.f32.mrb[0].mxu0
        %714 = vmatprep.mubr.bf16.mxu0 0
        %715 = vmatmul.mubr.bf16.gmra.mrb[0].mxu0 %v532
        %v716 = vpop.f32.mrb[0].mxu0
        %v717 = vadd.f32 0.0, %v716
        %v718 = vpop.f32.mrb[0].mxu0
        %v719 = vpop.f32.mrb[0].mxu0
        %v720 = vadd.f32 0.0, %v719
        %v721 = vpop.f32.mrb[0].mxu0
        %722 = vmatprep.mubr.bf16.mxu0 0
        %723 = vmatmul.mubr.bf16.gmra.mrb[0].mxu0 %v533
        %v724 = vpop.f32.mrb[0].mxu0
        %v725 = vadd.f32 0.0, %v724
        %v726 = vpop.f32.mrb[0].mxu0
        %v727 = vpop.f32.mrb[0].mxu0
        %v728 = vadd.f32 0.0, %v727
        %v729 = vpop.f32.mrb[0].mxu0
        %730 = vmatprep.mubr.bf16.mxu0 0
        %731 = vmatmul.mubr.bf16.gmra.mrb[0].mxu0 %v534
        %v732 = vpop.f32.mrb[0].mxu0
        %v733 = vadd.f32 0.0, %v732
        %v734 = vpop.f32.mrb[0].mxu0
        %v735 = vpop.f32.mrb[0].mxu0
        %v736 = vadd.f32 0.0, %v735
        %v737 = vpop.f32.mrb[0].mxu0
        %738 = vmatprep.mubr.bf16.mxu0 0
        %739 = vmatmul.mubr.bf16.gmra.mrb[0].mxu0 %v535
        %v740 = vpop.f32.mrb[0].mxu0
        %v741 = vadd.f32 0.0, %v740
        %v742 = vpop.f32.mrb[0].mxu0
        %v743 = vpop.f32.mrb[0].mxu0
        %v744 = vadd.f32 0.0, %v743
        %v745 = vpop.f32.mrb[0].mxu0
        %746 = vmatprep.mubr.bf16.mxu0 0
        %747 = vmatmul.mubr.bf16.gmra.mrb[0].mxu0 %v536
        %v748 = vpop.f32.mrb[0].mxu0
        %v749 = vadd.f32 0.0, %v748
        %v750 = vpop.f32.mrb[0].mxu0
        %v751 = vpop.f32.mrb[0].mxu0
        %v752 = vadd.f32 0.0, %v751
        %v753 = vpop.f32.mrb[0].mxu0
        %754 = vmatprep.mubr.bf16.mxu0 0
        %755 = vmatmul.mubr.bf16.gmra.mrb[0].mxu0 %v537
        %v756 = vpop.f32.mrb[0].mxu0
        %v757 = vadd.f32 0.0, %v756
        %v758 = vpop.f32.mrb[0].mxu0
        %v759 = vpop.f32.mrb[0].mxu0
        %v760 = vadd.f32 0.0, %v759
        %v761 = vpop.f32.mrb[0].mxu0
        %762 = vdwg.mxu0
        %v763 = vpack.c.bf16 %v640, %v637
        %v764 = vpack.c.bf16 %v648, %v645
        %v765 = vpack.c.bf16 %v656, %v653
        %v766 = vpack.c.bf16 %v664, %v661
        %v767 = vpack.c.bf16 %v672, %v669
        %v768 = vpack.c.bf16 %v680, %v677
        %v769 = vpack.c.bf16 %v688, %v685
        %v770 = vpack.c.bf16 %v696, %v693
        %v771 = vpack.c.bf16 %v704, %v701
        %v772 = vpack.c.bf16 %v712, %v709
        %v773 = vpack.c.bf16 %v720, %v717
        %v774 = vpack.c.bf16 %v728, %v725
        %v775 = vpack.c.bf16 %v736, %v733
        %v776 = vpack.c.bf16 %v744, %v741
        %v777 = vpack.c.bf16 %v752, %v749
        %v778 = vpack.c.bf16 %v760, %v757
        %779 = vst [vmem:[#allocation2] sm:$0xff] %v763
        %780 = vst [vmem:[#allocation2 + $0x8] sm:$0xff] %v764
        %781 = vst [vmem:[#allocation2 + $0x10] sm:$0xff] %v765
        %782 = vst [vmem:[#allocation2 + $0x18] sm:$0xff] %v766
        %783 = vst [vmem:[#allocation2 + $0x20] sm:$0xff] %v767
        %784 = vst [vmem:[#allocation2 + $0x28] sm:$0xff] %v768
        %785 = vst [vmem:[#allocation2 + $0x30] sm:$0xff] %v769
        %786 = vst [vmem:[#allocation2 + $0x38] sm:$0xff] %v770
        %787 = vst [vmem:[#allocation2 + $0x40] sm:$0xff] %v771
        %788 = vst [vmem:[#allocation2 + $0x48] sm:$0xff] %v772
        %789 = vst [vmem:[#allocation2 + $0x50] sm:$0xff] %v773
        %790 = vst [vmem:[#allocation2 + $0x58] sm:$0xff] %v774
        %791 = vst [vmem:[#allocation2 + $0x60] sm:$0xff] %v775
        %792 = vst [vmem:[#allocation2 + $0x68] sm:$0xff] %v776
        %793 = vst [vmem:[#allocation2 + $0x70] sm:$0xff] %v777
        %794 = vst [vmem:[#allocation2 + $0x78] sm:$0xff] %v778
        %795 = vst [vmem:[%s404] sm:$0x1] 0.0
      $region52: #{mp_encoder_forward.4} parent=47 // pred_fallthru
        _
      %v796 = vld [vmem:[%s384] sm:$0xff]
      %v797 = vld [vmem:[%s384 + $0x8] sm:$0xff]
      %v798 = vld [vmem:[%s384 + $0x10] sm:$0xff]
      %v799 = vld [vmem:[%s384 + $0x18] sm:$0xff]
      %v800 = vld [vmem:[%s384 + $0x20] sm:$0xff]
      %v801 = vld [vmem:[%s384 + $0x28] sm:$0xff]
      %v802 = vld [vmem:[%s384 + $0x30] sm:$0xff]
      %v803 = vld [vmem:[%s384 + $0x38] sm:$0xff]
      %v804 = vld [vmem:[%s384 + $0x40] sm:$0xff]
      %v805 = vld [vmem:[%s384 + $0x48] sm:$0xff]
      %v806 = vld [vmem:[%s384 + $0x50] sm:$0xff]
      %v807 = vld [vmem:[%s384 + $0x58] sm:$0xff]
      %v808 = vld [vmem:[%s384 + $0x60] sm:$0xff]
      %v809 = vld [vmem:[%s384 + $0x68] sm:$0xff]
      %v810 = vld [vmem:[%s384 + $0x70] sm:$0xff]
      %v811 = vld [vmem:[%s384 + $0x78] sm:$0xff]
      %v812 = vld [vmem:[%s384 + $0x80] sm:$0xff]
      %v813 = vld [vmem:[%s384 + $0x88] sm:$0xff]
      %v814 = vld [vmem:[%s384 + $0x90] sm:$0xff]
      %v815 = vld [vmem:[%s384 + $0x98] sm:$0xff]
      %v816 = vld [vmem:[%s384 + $0xa0] sm:$0xff]
      %v817 = vld [vmem:[%s384 + $0xa8] sm:$0xff]
      %v818 = vld [vmem:[%s384 + $0xb0] sm:$0xff]
      %v819 = vld [vmem:[%s384 + $0xb8] sm:$0xff]
      %v820 = vld [vmem:[%s384 + $0xc0] sm:$0xff]
      %v821 = vld [vmem:[%s384 + $0xc8] sm:$0xff]
      %v822 = vld [vmem:[%s384 + $0xd0] sm:$0xff]
      %v823 = vld [vmem:[%s384 + $0xd8] sm:$0xff]
      %v824 = vld [vmem:[%s384 + $0xe0] sm:$0xff]
      %v825 = vld [vmem:[%s384 + $0xe8] sm:$0xff]
      %v826 = vld [vmem:[%s384 + $0xf0] sm:$0xff]
      %v827 = vld [vmem:[%s384 + $0xf8] sm:$0xff]
      %v828 = vld [vmem:[#allocation2] sm:$0xff]
      %v829 = vld [vmem:[#allocation2 + $0x8] sm:$0xff]
      %v830 = vld [vmem:[#allocation2 + $0x10] sm:$0xff]
      %v831 = vld [vmem:[#allocation2 + $0x18] sm:$0xff]
      %v832 = vld [vmem:[#allocation2 + $0x20] sm:$0xff]
      %v833 = vld [vmem:[#allocation2 + $0x28] sm:$0xff]
      %v834 = vld [vmem:[#allocation2 + $0x30] sm:$0xff]
      %v835 = vld [vmem:[#allocation2 + $0x38] sm:$0xff]
      %v836 = vld [vmem:[#allocation2 + $0x40] sm:$0xff]
      %v837 = vld [vmem:[#allocation2 + $0x48] sm:$0xff]
      %v838 = vld [vmem:[#allocation2 + $0x50] sm:$0xff]
      %v839 = vld [vmem:[#allocation2 + $0x58] sm:$0xff]
      %v840 = vld [vmem:[#allocation2 + $0x60] sm:$0xff]
      %v841 = vld [vmem:[#allocation2 + $0x68] sm:$0xff]
      %v842 = vld [vmem:[#allocation2 + $0x70] sm:$0xff]
      %v843 = vld [vmem:[#allocation2 + $0x78] sm:$0xff]
      %v844 = vld [vmem:[%s388] sm:$0x1]
      %v846 = vlaneseq
      %v847 = vshrl.u32 %v846, 7
      %v848 = vsub.s32 0, %v847
      %v849 = vrot.slane %v844, %v848
      %v883 = vunpack.c.l.b16 %v796
      %v884 = vunpack.c.h.b16 %v796
      %v885 = vunpack.c.l.b16 %v797
      %v886 = vunpack.c.h.b16 %v797
      %v887 = vunpack.c.l.b16 %v798
      %v888 = vunpack.c.h.b16 %v798
      %v889 = vunpack.c.l.b16 %v799
      %v890 = vunpack.c.h.b16 %v799
      %v891 = vunpack.c.l.b16 %v800
      %v892 = vunpack.c.h.b16 %v800
      %v893 = vunpack.c.l.b16 %v801
      %v894 = vunpack.c.h.b16 %v801
      %v895 = vunpack.c.l.b16 %v802
      %v896 = vunpack.c.h.b16 %v802
      %v897 = vunpack.c.l.b16 %v803
      %v898 = vunpack.c.h.b16 %v803
      %v899 = vunpack.c.l.b16 %v804
      %v900 = vunpack.c.h.b16 %v804
      %v901 = vunpack.c.l.b16 %v805
      %v902 = vunpack.c.h.b16 %v805
      %v903 = vunpack.c.l.b16 %v806
      %v904 = vunpack.c.h.b16 %v806
      %v905 = vunpack.c.l.b16 %v807
      %v906 = vunpack.c.h.b16 %v807
      %v907 = vunpack.c.l.b16 %v808
      %v908 = vunpack.c.h.b16 %v808
      %v909 = vunpack.c.l.b16 %v809
      %v910 = vunpack.c.h.b16 %v809
      %v911 = vunpack.c.l.b16 %v810
      %v912 = vunpack.c.h.b16 %v810
      %v913 = vunpack.c.l.b16 %v811
      %v914 = vunpack.c.h.b16 %v811
      %v915 = vunpack.c.l.b16 %v812
      %v916 = vunpack.c.h.b16 %v812
      %v917 = vunpack.c.l.b16 %v813
      %v918 = vunpack.c.h.b16 %v813
      %v919 = vunpack.c.l.b16 %v814
      %v920 = vunpack.c.h.b16 %v814
      %v921 = vunpack.c.l.b16 %v815
      %v922 = vunpack.c.h.b16 %v815
      %v923 = vunpack.c.l.b16 %v816
      %v924 = vunpack.c.h.b16 %v816
      %v925 = vunpack.c.l.b16 %v817
      %v926 = vunpack.c.h.b16 %v817
      %v927 = vunpack.c.l.b16 %v818
      %v928 = vunpack.c.h.b16 %v818
      %v929 = vunpack.c.l.b16 %v819
      %v930 = vunpack.c.h.b16 %v819
      %v931 = vunpack.c.l.b16 %v820
      %v932 = vunpack.c.h.b16 %v820
      %v933 = vunpack.c.l.b16 %v821
      %v934 = vunpack.c.h.b16 %v821
      %v935 = vunpack.c.l.b16 %v822
      %v936 = vunpack.c.h.b16 %v822
      %v937 = vunpack.c.l.b16 %v823
      %v938 = vunpack.c.h.b16 %v823
      %v939 = vunpack.c.l.b16 %v824
      %v940 = vunpack.c.h.b16 %v824
      %v941 = vunpack.c.l.b16 %v825
      %v942 = vunpack.c.h.b16 %v825
      %v943 = vunpack.c.l.b16 %v826
      %v944 = vunpack.c.h.b16 %v826
      %v945 = vunpack.c.l.b16 %v827
      %v946 = vunpack.c.h.b16 %v827
      %v947 = vpack.c.b16 %v885, %v883
      %v948 = vpack.c.b16 %v886, %v884
      %v949 = vpack.c.b16 %v889, %v887
      %v950 = vpack.c.b16 %v890, %v888
      %v951 = vpack.c.b16 %v893, %v891
      %v952 = vpack.c.b16 %v894, %v892
      %v953 = vpack.c.b16 %v897, %v895
      %v954 = vpack.c.b16 %v898, %v896
      %v955 = vpack.c.b16 %v901, %v899
      %v956 = vpack.c.b16 %v902, %v900
      %v957 = vpack.c.b16 %v905, %v903
      %v958 = vpack.c.b16 %v906, %v904
      %v959 = vpack.c.b16 %v909, %v907
      %v960 = vpack.c.b16 %v910, %v908
      %v961 = vpack.c.b16 %v913, %v911
      %v962 = vpack.c.b16 %v914, %v912
      %v963 = vpack.c.b16 %v917, %v915
      %v964 = vpack.c.b16 %v918, %v916
      %v965 = vpack.c.b16 %v921, %v919
      %v966 = vpack.c.b16 %v922, %v920
      %v967 = vpack.c.b16 %v925, %v923
      %v968 = vpack.c.b16 %v926, %v924
      %v969 = vpack.c.b16 %v929, %v927
      %v970 = vpack.c.b16 %v930, %v928
      %v971 = vpack.c.b16 %v933, %v931
      %v972 = vpack.c.b16 %v934, %v932
      %v973 = vpack.c.b16 %v937, %v935
      %v974 = vpack.c.b16 %v938, %v936
      %v975 = vpack.c.b16 %v941, %v939
      %v976 = vpack.c.b16 %v942, %v940
      %v977 = vpack.c.b16 %v945, %v943
      %v978 = vpack.c.b16 %v946, %v944
      %1011 = vmatprep.subr.bf16.mxu0 0
      %1012 = vmatpush1.bf16.msra.mxu0 %v828
      %1013 = vmatprep.subr.bf16.mxu0 0
      %1014 = vmatpush1.bf16.msra.mxu0 %v829
      %1015 = vmatprep.subr.bf16.mxu0 0
      %1016 = vmatpush1.bf16.msra.mxu0 %v830
      %1017 = vmatprep.subr.bf16.mxu0 0
      %1018 = vmatpush1.bf16.msra.mxu0 %v831
      %1019 = vmatprep.subr.bf16.mxu0 0
      %1020 = vmatpush1.bf16.msra.mxu0 %v832
      %1021 = vmatprep.subr.bf16.mxu0 0
      %1022 = vmatpush1.bf16.msra.mxu0 %v833
      %1023 = vmatprep.subr.bf16.mxu0 0
      %1024 = vmatpush1.bf16.msra.mxu0 %v834
      %1025 = vmatprep.subr.bf16.mxu0 0
      %1026 = vmatpush1.bf16.msra.mxu0 %v835
      %1027 = vmatprep.subr.bf16.mxu0 0
      %1028 = vmatpush1.bf16.msra.mxu0 %v836
      %1029 = vmatprep.subr.bf16.mxu0 0
      %1030 = vmatpush1.bf16.msra.mxu0 %v837
      %1031 = vmatprep.subr.bf16.mxu0 0
      %1032 = vmatpush1.bf16.msra.mxu0 %v838
      %1033 = vmatprep.subr.bf16.mxu0 0
      %1034 = vmatpush1.bf16.msra.mxu0 %v839
      %1035 = vmatprep.subr.bf16.mxu0 0
      %1036 = vmatpush1.bf16.msra.mxu0 %v840
      %1037 = vmatprep.subr.bf16.mxu0 0
      %1038 = vmatpush1.bf16.msra.mxu0 %v841
      %1039 = vmatprep.subr.bf16.mxu0 0
      %1040 = vmatpush1.bf16.msra.mxu0 %v842
      %1041 = vmatprep.subr.bf16.mxu0 0
      %1042 = vmatpush1.bf16.msra.mxu0 %v843
      %1043 = vmatprep.mubr.bf16.mxu0 %v948
      %1044 = vmatmul.mubr.bf16.gmra.mrb[0].mxu0 %v947
      %v1045 = vpop.f32.mrb[0].mxu0
      %v1046 = vadd.f32 %v849, %v1045
      %v1047 = vpop.f32.mrb[0].mxu0
      %v1048 = vpop.f32.mrb[0].mxu0
      %v1049 = vadd.f32 %v849, %v1048
      %v1050 = vpop.f32.mrb[0].mxu0
      %1051 = vmatprep.mubr.bf16.mxu0 %v950
      %1052 = vmatmul.mubr.bf16.gmra.mrb[0].mxu0 %v949
      %v1053 = vpop.f32.mrb[0].mxu0
      %v1054 = vadd.f32 %v849, %v1053
      %v1055 = vpop.f32.mrb[0].mxu0
      %v1056 = vpop.f32.mrb[0].mxu0
      %v1057 = vadd.f32 %v849, %v1056
      %v1058 = vpop.f32.mrb[0].mxu0
      %1059 = vmatprep.mubr.bf16.mxu0 %v952
      %1060 = vmatmul.mubr.bf16.gmra.mrb[0].mxu0 %v951
      %v1061 = vpop.f32.mrb[0].mxu0
      %v1062 = vadd.f32 %v849, %v1061
      %v1063 = vpop.f32.mrb[0].mxu0
      %v1064 = vpop.f32.mrb[0].mxu0
      %v1065 = vadd.f32 %v849, %v1064
      %v1066 = vpop.f32.mrb[0].mxu0
      %1067 = vmatprep.mubr.bf16.mxu0 %v954
      %1068 = vmatmul.mubr.bf16.gmra.mrb[0].mxu0 %v953
      %v1069 = vpop.f32.mrb[0].mxu0
      %v1070 = vadd.f32 %v849, %v1069
      %v1071 = vpop.f32.mrb[0].mxu0
      %v1072 = vpop.f32.mrb[0].mxu0
      %v1073 = vadd.f32 %v849, %v1072
      %v1074 = vpop.f32.mrb[0].mxu0
      %1075 = vmatprep.mubr.bf16.mxu0 %v956
      %1076 = vmatmul.mubr.bf16.gmra.mrb[0].mxu0 %v955
      %v1077 = vpop.f32.mrb[0].mxu0
      %v1078 = vadd.f32 %v849, %v1077
      %v1079 = vpop.f32.mrb[0].mxu0
      %v1080 = vpop.f32.mrb[0].mxu0
      %v1081 = vadd.f32 %v849, %v1080
      %v1082 = vpop.f32.mrb[0].mxu0
      %1083 = vmatprep.mubr.bf16.mxu0 %v958
      %1084 = vmatmul.mubr.bf16.gmra.mrb[0].mxu0 %v957
      %v1085 = vpop.f32.mrb[0].mxu0
      %v1086 = vadd.f32 %v849, %v1085
      %v1087 = vpop.f32.mrb[0].mxu0
      %v1088 = vpop.f32.mrb[0].mxu0
      %v1089 = vadd.f32 %v849, %v1088
      %v1090 = vpop.f32.mrb[0].mxu0
      %1091 = vmatprep.mubr.bf16.mxu0 %v960
      %1092 = vmatmul.mubr.bf16.gmra.mrb[0].mxu0 %v959
      %v1093 = vpop.f32.mrb[0].mxu0
      %v1094 = vadd.f32 %v849, %v1093
      %v1095 = vpop.f32.mrb[0].mxu0
      %v1096 = vpop.f32.mrb[0].mxu0
      %v1097 = vadd.f32 %v849, %v1096
      %v1098 = vpop.f32.mrb[0].mxu0
      %1099 = vmatprep.mubr.bf16.mxu0 %v962
      %1100 = vmatmul.mubr.bf16.gmra.mrb[0].mxu0 %v961
      %v1101 = vpop.f32.mrb[0].mxu0
      %v1102 = vadd.f32 %v849, %v1101
      %v1103 = vpop.f32.mrb[0].mxu0
      %v1104 = vpop.f32.mrb[0].mxu0
      %v1105 = vadd.f32 %v849, %v1104
      %v1106 = vpop.f32.mrb[0].mxu0
      %1107 = vmatprep.mubr.bf16.mxu0 %v964
      %1108 = vmatmul.mubr.bf16.gmra.mrb[0].mxu0 %v963
      %v1109 = vpop.f32.mrb[0].mxu0
      %v1110 = vadd.f32 %v849, %v1109
      %v1111 = vpop.f32.mrb[0].mxu0
      %v1112 = vpop.f32.mrb[0].mxu0
      %v1113 = vadd.f32 %v849, %v1112
      %v1114 = vpop.f32.mrb[0].mxu0
      %1115 = vmatprep.mubr.bf16.mxu0 %v966
      %1116 = vmatmul.mubr.bf16.gmra.mrb[0].mxu0 %v965
      %v1117 = vpop.f32.mrb[0].mxu0
      %v1118 = vadd.f32 %v849, %v1117
      %v1119 = vpop.f32.mrb[0].mxu0
      %v1120 = vpop.f32.mrb[0].mxu0
      %v1121 = vadd.f32 %v849, %v1120
      %v1122 = vpop.f32.mrb[0].mxu0
      %1123 = vmatprep.mubr.bf16.mxu0 %v968
      %1124 = vmatmul.mubr.bf16.gmra.mrb[0].mxu0 %v967
      %v1125 = vpop.f32.mrb[0].mxu0
      %v1126 = vadd.f32 %v849, %v1125
      %v1127 = vpop.f32.mrb[0].mxu0
      %v1128 = vpop.f32.mrb[0].mxu0
      %v1129 = vadd.f32 %v849, %v1128
      %v1130 = vpop.f32.mrb[0].mxu0
      %1131 = vmatprep.mubr.bf16.mxu0 %v970
      %1132 = vmatmul.mubr.bf16.gmra.mrb[0].mxu0 %v969
      %v1133 = vpop.f32.mrb[0].mxu0
      %v1134 = vadd.f32 %v849, %v1133
      %v1135 = vpop.f32.mrb[0].mxu0
      %v1136 = vpop.f32.mrb[0].mxu0
      %v1137 = vadd.f32 %v849, %v1136
      %v1138 = vpop.f32.mrb[0].mxu0
      %1139 = vmatprep.mubr.bf16.mxu0 %v972
      %1140 = vmatmul.mubr.bf16.gmra.mrb[0].mxu0 %v971
      %v1141 = vpop.f32.mrb[0].mxu0
      %v1142 = vadd.f32 %v849, %v1141
      %v1143 = vpop.f32.mrb[0].mxu0
      %v1144 = vpop.f32.mrb[0].mxu0
      %v1145 = vadd.f32 %v849, %v1144
      %v1146 = vpop.f32.mrb[0].mxu0
      %1147 = vmatprep.mubr.bf16.mxu0 %v974
      %1148 = vmatmul.mubr.bf16.gmra.mrb[0].mxu0 %v973
      %v1149 = vpop.f32.mrb[0].mxu0
      %v1150 = vadd.f32 %v849, %v1149
      %v1151 = vpop.f32.mrb[0].mxu0
      %v1152 = vpop.f32.mrb[0].mxu0
      %v1153 = vadd.f32 %v849, %v1152
      %v1154 = vpop.f32.mrb[0].mxu0
      %1155 = vmatprep.mubr.bf16.mxu0 %v976
      %1156 = vmatmul.mubr.bf16.gmra.mrb[0].mxu0 %v975
      %v1157 = vpop.f32.mrb[0].mxu0
      %v1158 = vadd.f32 %v849, %v1157
      %v1159 = vpop.f32.mrb[0].mxu0
      %v1160 = vpop.f32.mrb[0].mxu0
      %v1161 = vadd.f32 %v849, %v1160
      %v1162 = vpop.f32.mrb[0].mxu0
      %1163 = vmatprep.mubr.bf16.mxu0 %v978
      %1164 = vmatmul.mubr.bf16.gmra.mrb[0].mxu0 %v977
      %v1165 = vpop.f32.mrb[0].mxu0
      %v1166 = vadd.f32 %v849, %v1165
      %v1167 = vpop.f32.mrb[0].mxu0
      %v1168 = vpop.f32.mrb[0].mxu0
      %v1169 = vadd.f32 %v849, %v1168
      %v1170 = vpop.f32.mrb[0].mxu0
      %1171 = vdwg.mxu0
      %vm1172 = vcmp.ge.f32.partialorder %v1046, 0.0
      %vm1173 = vcmp.ge.f32.partialorder %v1049, 0.0
      %vm1174 = vcmp.ge.f32.partialorder %v1054, 0.0
      %vm1175 = vcmp.ge.f32.partialorder %v1057, 0.0
      %vm1176 = vcmp.ge.f32.partialorder %v1062, 0.0
      %vm1177 = vcmp.ge.f32.partialorder %v1065, 0.0
      %vm1178 = vcmp.ge.f32.partialorder %v1070, 0.0
      %vm1179 = vcmp.ge.f32.partialorder %v1073, 0.0
      %vm1180 = vcmp.ge.f32.partialorder %v1078, 0.0
      %vm1181 = vcmp.ge.f32.partialorder %v1081, 0.0
      %vm1182 = vcmp.ge.f32.partialorder %v1086, 0.0
      %vm1183 = vcmp.ge.f32.partialorder %v1089, 0.0
      %vm1184 = vcmp.ge.f32.partialorder %v1094, 0.0
      %vm1185 = vcmp.ge.f32.partialorder %v1097, 0.0
      %vm1186 = vcmp.ge.f32.partialorder %v1102, 0.0
      %vm1187 = vcmp.ge.f32.partialorder %v1105, 0.0
      %vm1188 = vcmp.ge.f32.partialorder %v1110, 0.0
      %vm1189 = vcmp.ge.f32.partialorder %v1113, 0.0
      %vm1190 = vcmp.ge.f32.partialorder %v1118, 0.0
      %vm1191 = vcmp.ge.f32.partialorder %v1121, 0.0
      %vm1192 = vcmp.ge.f32.partialorder %v1126, 0.0
      %vm1193 = vcmp.ge.f32.partialorder %v1129, 0.0
      %vm1194 = vcmp.ge.f32.partialorder %v1134, 0.0
      %vm1195 = vcmp.ge.f32.partialorder %v1137, 0.0
      %vm1196 = vcmp.ge.f32.partialorder %v1142, 0.0
      %vm1197 = vcmp.ge.f32.partialorder %v1145, 0.0
      %vm1198 = vcmp.ge.f32.partialorder %v1150, 0.0
      %vm1199 = vcmp.ge.f32.partialorder %v1153, 0.0
      %vm1200 = vcmp.ge.f32.partialorder %v1158, 0.0
      %vm1201 = vcmp.ge.f32.partialorder %v1161, 0.0
      %vm1202 = vcmp.ge.f32.partialorder %v1166, 0.0
      %vm1203 = vcmp.ge.f32.partialorder %v1169, 0.0
      %v1204 = vld [vmem:[%s391] sm:$0x1]
      %v1206 = vlaneseq
      %v1207 = vshrl.u32 %v1206, 7
      %v1208 = vsub.s32 0, %v1207
      %v1209 = vrot.slane %v1204, %v1208
      %v1211 = vmul.f32 %v1209, %v1046
      %v1212 = vmul.f32 %v1209, %v1049
      %v1213 = vmul.f32 %v1209, %v1054
      %v1214 = vmul.f32 %v1209, %v1057
      %v1215 = vmul.f32 %v1209, %v1062
      %v1216 = vmul.f32 %v1209, %v1065
      %v1217 = vmul.f32 %v1209, %v1070
      %v1218 = vmul.f32 %v1209, %v1073
      %v1219 = vmul.f32 %v1209, %v1078
      %v1220 = vmul.f32 %v1209, %v1081
      %v1221 = vmul.f32 %v1209, %v1086
      %v1222 = vmul.f32 %v1209, %v1089
      %v1223 = vmul.f32 %v1209, %v1094
      %v1224 = vmul.f32 %v1209, %v1097
      %v1225 = vmul.f32 %v1209, %v1102
      %v1226 = vmul.f32 %v1209, %v1105
      %v1227 = vmul.f32 %v1209, %v1110
      %v1228 = vmul.f32 %v1209, %v1113
      %v1229 = vmul.f32 %v1209, %v1118
      %v1230 = vmul.f32 %v1209, %v1121
      %v1231 = vmul.f32 %v1209, %v1126
      %v1232 = vmul.f32 %v1209, %v1129
      %v1233 = vmul.f32 %v1209, %v1134
      %v1234 = vmul.f32 %v1209, %v1137
      %v1235 = vmul.f32 %v1209, %v1142
      %v1236 = vmul.f32 %v1209, %v1145
      %v1237 = vmul.f32 %v1209, %v1150
      %v1238 = vmul.f32 %v1209, %v1153
      %v1239 = vmul.f32 %v1209, %v1158
      %v1240 = vmul.f32 %v1209, %v1161
      %v1241 = vmul.f32 %v1209, %v1166
      %v1242 = vmul.f32 %v1209, %v1169
      %v1243 = vsel %vm1172, %v1046, %v1211
      %v1244 = vsel %vm1173, %v1049, %v1212
      %v1245 = vsel %vm1174, %v1054, %v1213
      %v1246 = vsel %vm1175, %v1057, %v1214
      %v1247 = vsel %vm1176, %v1062, %v1215
      %v1248 = vsel %vm1177, %v1065, %v1216
      %v1249 = vsel %vm1178, %v1070, %v1217
      %v1250 = vsel %vm1179, %v1073, %v1218
      %v1251 = vsel %vm1180, %v1078, %v1219
      %v1252 = vsel %vm1181, %v1081, %v1220
      %v1253 = vsel %vm1182, %v1086, %v1221
      %v1254 = vsel %vm1183, %v1089, %v1222
      %v1255 = vsel %vm1184, %v1094, %v1223
      %v1256 = vsel %vm1185, %v1097, %v1224
      %v1257 = vsel %vm1186, %v1102, %v1225
      %v1258 = vsel %vm1187, %v1105, %v1226
      %v1259 = vsel %vm1188, %v1110, %v1227
      %v1260 = vsel %vm1189, %v1113, %v1228
      %v1261 = vsel %vm1190, %v1118, %v1229
      %v1262 = vsel %vm1191, %v1121, %v1230
      %v1263 = vsel %vm1192, %v1126, %v1231
      %v1264 = vsel %vm1193, %v1129, %v1232
      %v1265 = vsel %vm1194, %v1134, %v1233
      %v1266 = vsel %vm1195, %v1137, %v1234
      %v1267 = vsel %vm1196, %v1142, %v1235
      %v1268 = vsel %vm1197, %v1145, %v1236
      %v1269 = vsel %vm1198, %v1150, %v1237
      %v1270 = vsel %vm1199, %v1153, %v1238
      %v1271 = vsel %vm1200, %v1158, %v1239
      %v1272 = vsel %vm1201, %v1161, %v1240
      %v1273 = vsel %vm1202, %v1166, %v1241
      %v1274 = vsel %vm1203, %v1169, %v1242
      %v1275 = vpack.c.bf16 %v1244, %v1243
      %v1276 = vpack.c.bf16 %v1246, %v1245
      %v1277 = vpack.c.bf16 %v1248, %v1247
      %v1278 = vpack.c.bf16 %v1250, %v1249
      %v1279 = vpack.c.bf16 %v1252, %v1251
      %v1280 = vpack.c.bf16 %v1254, %v1253
      %v1281 = vpack.c.bf16 %v1256, %v1255
      %v1282 = vpack.c.bf16 %v1258, %v1257
      %v1283 = vpack.c.bf16 %v1260, %v1259
      %v1284 = vpack.c.bf16 %v1262, %v1261
      %v1285 = vpack.c.bf16 %v1264, %v1263
      %v1286 = vpack.c.bf16 %v1266, %v1265
      %v1287 = vpack.c.bf16 %v1268, %v1267
      %v1288 = vpack.c.bf16 %v1270, %v1269
      %v1289 = vpack.c.bf16 %v1272, %v1271
      %v1290 = vpack.c.bf16 %v1274, %v1273
      %v1307 = vunpack.c.l.b16 %v1275
      %v1308 = vunpack.c.h.b16 %v1275
      %v1309 = vunpack.c.l.b16 %v1276
      %v1310 = vunpack.c.h.b16 %v1276
      %v1311 = vunpack.c.l.b16 %v1277
      %v1312 = vunpack.c.h.b16 %v1277
      %v1313 = vunpack.c.l.b16 %v1278
      %v1314 = vunpack.c.h.b16 %v1278
      %v1315 = vunpack.c.l.b16 %v1279
      %v1316 = vunpack.c.h.b16 %v1279
      %v1317 = vunpack.c.l.b16 %v1280
      %v1318 = vunpack.c.h.b16 %v1280
      %v1319 = vunpack.c.l.b16 %v1281
      %v1320 = vunpack.c.h.b16 %v1281
      %v1321 = vunpack.c.l.b16 %v1282
      %v1322 = vunpack.c.h.b16 %v1282
      %v1323 = vunpack.c.l.b16 %v1283
      %v1324 = vunpack.c.h.b16 %v1283
      %v1325 = vunpack.c.l.b16 %v1284
      %v1326 = vunpack.c.h.b16 %v1284
      %v1327 = vunpack.c.l.b16 %v1285
      %v1328 = vunpack.c.h.b16 %v1285
      %v1329 = vunpack.c.l.b16 %v1286
      %v1330 = vunpack.c.h.b16 %v1286
      %v1331 = vunpack.c.l.b16 %v1287
      %v1332 = vunpack.c.h.b16 %v1287
      %v1333 = vunpack.c.l.b16 %v1288
      %v1334 = vunpack.c.h.b16 %v1288
      %v1335 = vunpack.c.l.b16 %v1289
      %v1336 = vunpack.c.h.b16 %v1289
      %v1337 = vunpack.c.l.b16 %v1290
      %v1338 = vunpack.c.h.b16 %v1290
      %v1339 = vpack.c.b16 %v1307, %v1307
      %v1340 = vpack.c.b16 %v1308, %v1308
      %v1341 = vpack.c.b16 %v1309, %v1309
      %v1342 = vpack.c.b16 %v1310, %v1310
      %v1343 = vpack.c.b16 %v1311, %v1311
      %v1344 = vpack.c.b16 %v1312, %v1312
      %v1345 = vpack.c.b16 %v1313, %v1313
      %v1346 = vpack.c.b16 %v1314, %v1314
      %v1347 = vpack.c.b16 %v1315, %v1315
      %v1348 = vpack.c.b16 %v1316, %v1316
      %v1349 = vpack.c.b16 %v1317, %v1317
      %v1350 = vpack.c.b16 %v1318, %v1318
      %v1351 = vpack.c.b16 %v1319, %v1319
      %v1352 = vpack.c.b16 %v1320, %v1320
      %v1353 = vpack.c.b16 %v1321, %v1321
      %v1354 = vpack.c.b16 %v1322, %v1322
      %v1355 = vpack.c.b16 %v1323, %v1323
      %v1356 = vpack.c.b16 %v1324, %v1324
      %v1357 = vpack.c.b16 %v1325, %v1325
      %v1358 = vpack.c.b16 %v1326, %v1326
      %v1359 = vpack.c.b16 %v1327, %v1327
      %v1360 = vpack.c.b16 %v1328, %v1328
      %v1361 = vpack.c.b16 %v1329, %v1329
      %v1362 = vpack.c.b16 %v1330, %v1330
      %v1363 = vpack.c.b16 %v1331, %v1331
      %v1364 = vpack.c.b16 %v1332, %v1332
      %v1365 = vpack.c.b16 %v1333, %v1333
      %v1366 = vpack.c.b16 %v1334, %v1334
      %v1367 = vpack.c.b16 %v1335, %v1335
      %v1368 = vpack.c.b16 %v1336, %v1336
      %v1369 = vpack.c.b16 %v1337, %v1337
      %v1370 = vpack.c.b16 %v1338, %v1338
      %1403 = vst [vmem:[%s400] sm:$0xf] %v1339
      %1404 = vst [vmem:[%s400 + $0x4] sm:$0xf] %v1340
      %1405 = vst [vmem:[%s400 + $0x8] sm:$0xf] %v1341
      %1406 = vst [vmem:[%s400 + $0xc] sm:$0xf] %v1342
      %1407 = vst [vmem:[%s400 + $0x10] sm:$0xf] %v1343
      %1408 = vst [vmem:[%s400 + $0x14] sm:$0xf] %v1344
      %1409 = vst [vmem:[%s400 + $0x18] sm:$0xf] %v1345
      %1410 = vst [vmem:[%s400 + $0x1c] sm:$0xf] %v1346
      %1411 = vst [vmem:[%s400 + $0x20] sm:$0xf] %v1347
      %1412 = vst [vmem:[%s400 + $0x24] sm:$0xf] %v1348
      %1413 = vst [vmem:[%s400 + $0x28] sm:$0xf] %v1349
      %1414 = vst [vmem:[%s400 + $0x2c] sm:$0xf] %v1350
      %1415 = vst [vmem:[%s400 + $0x30] sm:$0xf] %v1351
      %1416 = vst [vmem:[%s400 + $0x34] sm:$0xf] %v1352
      %1417 = vst [vmem:[%s400 + $0x38] sm:$0xf] %v1353
      %1418 = vst [vmem:[%s400 + $0x3c] sm:$0xf] %v1354
      %1419 = vst [vmem:[%s400 + $0x40] sm:$0xf] %v1355
      %1420 = vst [vmem:[%s400 + $0x44] sm:$0xf] %v1356
      %1421 = vst [vmem:[%s400 + $0x48] sm:$0xf] %v1357
      %1422 = vst [vmem:[%s400 + $0x4c] sm:$0xf] %v1358
      %1423 = vst [vmem:[%s400 + $0x50] sm:$0xf] %v1359
      %1424 = vst [vmem:[%s400 + $0x54] sm:$0xf] %v1360
      %1425 = vst [vmem:[%s400 + $0x58] sm:$0xf] %v1361
      %1426 = vst [vmem:[%s400 + $0x5c] sm:$0xf] %v1362
      %1427 = vst [vmem:[%s400 + $0x60] sm:$0xf] %v1363
      %1428 = vst [vmem:[%s400 + $0x64] sm:$0xf] %v1364
      %1429 = vst [vmem:[%s400 + $0x68] sm:$0xf] %v1365
      %1430 = vst [vmem:[%s400 + $0x6c] sm:$0xf] %v1366
      %1431 = vst [vmem:[%s400 + $0x70] sm:$0xf] %v1367
      %1432 = vst [vmem:[%s400 + $0x74] sm:$0xf] %v1368
      %1433 = vst [vmem:[%s400 + $0x78] sm:$0xf] %v1369
      %1434 = vst [vmem:[%s400 + $0x7c] sm:$0xf] %v1370
      %v1435 = vld [vmem:[%s5] sm:$0xf]
      %v1436 = vld [vmem:[%s5 + $0x4] sm:$0xf]
      %v1437 = vld [vmem:[%s5 + $0x8] sm:$0xf]
      %v1438 = vld [vmem:[%s5 + $0xc] sm:$0xf]
      %v1439 = vld [vmem:[%s5 + $0x10] sm:$0xf]
      %v1440 = vld [vmem:[%s5 + $0x14] sm:$0xf]
      %v1441 = vld [vmem:[%s5 + $0x18] sm:$0xf]
      %v1442 = vld [vmem:[%s5 + $0x1c] sm:$0xf]
      %v1443 = vld [vmem:[%s5 + $0x20] sm:$0xf]
      %v1444 = vld [vmem:[%s5 + $0x24] sm:$0xf]
      %v1445 = vld [vmem:[%s5 + $0x28] sm:$0xf]
      %v1446 = vld [vmem:[%s5 + $0x2c] sm:$0xf]
      %v1447 = vld [vmem:[%s5 + $0x30] sm:$0xf]
      %v1448 = vld [vmem:[%s5 + $0x34] sm:$0xf]
      %v1449 = vld [vmem:[%s5 + $0x38] sm:$0xf]
      %v1450 = vld [vmem:[%s5 + $0x3c] sm:$0xf]
      %v1451 = vld [vmem:[%s6] sm:$0x1]
      %v1453 = vlaneseq
      %v1454 = vshrl.u32 %v1453, 7
      %v1455 = vsub.s32 0, %v1454
      %v1456 = vrot.slane %v1451, %v1455
      %v1474 = vunpack.c.l.b16 %v1435
      %v1475 = vunpack.c.l.b16 %v1436
      %v1476 = vunpack.c.l.b16 %v1437
      %v1477 = vunpack.c.l.b16 %v1438
      %v1478 = vunpack.c.l.b16 %v1439
      %v1479 = vunpack.c.l.b16 %v1440
      %v1480 = vunpack.c.l.b16 %v1441
      %v1481 = vunpack.c.l.b16 %v1442
      %v1482 = vunpack.c.l.b16 %v1443
      %v1483 = vunpack.c.l.b16 %v1444
      %v1484 = vunpack.c.l.b16 %v1445
      %v1485 = vunpack.c.l.b16 %v1446
      %v1486 = vunpack.c.l.b16 %v1447
      %v1487 = vunpack.c.l.b16 %v1448
      %v1488 = vunpack.c.l.b16 %v1449
      %v1489 = vunpack.c.l.b16 %v1450
      %v1490 = vpack.c.b16 %v1475, %v1474
      %v1491 = vpack.c.b16 %v1477, %v1476
      %v1492 = vpack.c.b16 %v1479, %v1478
      %v1493 = vpack.c.b16 %v1481, %v1480
      %v1494 = vpack.c.b16 %v1483, %v1482
      %v1495 = vpack.c.b16 %v1485, %v1484
      %v1496 = vpack.c.b16 %v1487, %v1486
      %v1497 = vpack.c.b16 %v1489, %v1488
      %1506 = vmatprep.subr.bf16.mxu0 0
      %1507 = vmatpush1.bf16.msra.mxu0 %v1490
      %1508 = vmatprep.subr.bf16.mxu0 0
      %1509 = vmatpush1.bf16.msra.mxu0 %v1491
      %1510 = vmatprep.subr.bf16.mxu0 0
      %1511 = vmatpush1.bf16.msra.mxu0 %v1492
      %1512 = vmatprep.subr.bf16.mxu0 0
      %1513 = vmatpush1.bf16.msra.mxu0 %v1493
      %1514 = vmatprep.subr.bf16.mxu0 0
      %1515 = vmatpush1.bf16.msra.mxu0 %v1494
      %1516 = vmatprep.subr.bf16.mxu0 0
      %1517 = vmatpush1.bf16.msra.mxu0 %v1495
      %1518 = vmatprep.subr.bf16.mxu0 0
      %1519 = vmatpush1.bf16.msra.mxu0 %v1496
      %1520 = vmatprep.subr.bf16.mxu0 0
      %1521 = vmatpush1.bf16.msra.mxu0 %v1497
      %1522 = vmatprep.subr.bf16.mxu0 0
      %1523 = vmatpush1.bf16.msra.mxu0 0
      %1524 = vmatprep.subr.bf16.mxu0 0
      %1525 = vmatpush1.bf16.msra.mxu0 0
      %1526 = vmatprep.subr.bf16.mxu0 0
      %1527 = vmatpush1.bf16.msra.mxu0 0
      %1528 = vmatprep.subr.bf16.mxu0 0
      %1529 = vmatpush1.bf16.msra.mxu0 0
      %1530 = vmatprep.subr.bf16.mxu0 0
      %1531 = vmatpush1.bf16.msra.mxu0 0
      %1532 = vmatprep.subr.bf16.mxu0 0
      %1533 = vmatpush1.bf16.msra.mxu0 0
      %1534 = vmatprep.subr.bf16.mxu0 0
      %1535 = vmatpush1.bf16.msra.mxu0 0
      %1536 = vmatprep.subr.bf16.mxu0 0
      %1537 = vmatpush1.bf16.msra.mxu0 0
      %1538 = vmatprep.mubr.bf16.mxu0 0
      %1539 = vmatmul.mubr.bf16.gmra.mrb[0].mxu0 %v1275
      %v1540 = vpop.f32.mrb[0].mxu0
      %v1541 = vadd.f32 %v1456, %v1540
      %v1542 = vpop.f32.mrb[0].mxu0
      %v1543 = vpop.f32.mrb[0].mxu0
      %v1544 = vadd.f32 %v1456, %v1543
      %v1545 = vpop.f32.mrb[0].mxu0
      %1546 = vmatprep.mubr.bf16.mxu0 0
      %1547 = vmatmul.mubr.bf16.gmra.mrb[0].mxu0 %v1276
      %v1548 = vpop.f32.mrb[0].mxu0
      %v1549 = vadd.f32 %v1456, %v1548
      %v1550 = vpop.f32.mrb[0].mxu0
      %v1551 = vpop.f32.mrb[0].mxu0
      %v1552 = vadd.f32 %v1456, %v1551
      %v1553 = vpop.f32.mrb[0].mxu0
      %1554 = vmatprep.mubr.bf16.mxu0 0
      %1555 = vmatmul.mubr.bf16.gmra.mrb[0].mxu0 %v1277
      %v1556 = vpop.f32.mrb[0].mxu0
      %v1557 = vadd.f32 %v1456, %v1556
      %v1558 = vpop.f32.mrb[0].mxu0
      %v1559 = vpop.f32.mrb[0].mxu0
      %v1560 = vadd.f32 %v1456, %v1559
      %v1561 = vpop.f32.mrb[0].mxu0
      %1562 = vmatprep.mubr.bf16.mxu0 0
      %1563 = vmatmul.mubr.bf16.gmra.mrb[0].mxu0 %v1278
      %v1564 = vpop.f32.mrb[0].mxu0
      %v1565 = vadd.f32 %v1456, %v1564
      %v1566 = vpop.f32.mrb[0].mxu0
      %v1567 = vpop.f32.mrb[0].mxu0
      %v1568 = vadd.f32 %v1456, %v1567
      %v1569 = vpop.f32.mrb[0].mxu0
      %1570 = vmatprep.mubr.bf16.mxu0 0
      %1571 = vmatmul.mubr.bf16.gmra.mrb[0].mxu0 %v1279
      %v1572 = vpop.f32.mrb[0].mxu0
      %v1573 = vadd.f32 %v1456, %v1572
      %v1574 = vpop.f32.mrb[0].mxu0
      %v1575 = vpop.f32.mrb[0].mxu0
      %v1576 = vadd.f32 %v1456, %v1575
      %v1577 = vpop.f32.mrb[0].mxu0
      %1578 = vmatprep.mubr.bf16.mxu0 0
      %1579 = vmatmul.mubr.bf16.gmra.mrb[0].mxu0 %v1280
      %v1580 = vpop.f32.mrb[0].mxu0
      %v1581 = vadd.f32 %v1456, %v1580
      %v1582 = vpop.f32.mrb[0].mxu0
      %v1583 = vpop.f32.mrb[0].mxu0
      %v1584 = vadd.f32 %v1456, %v1583
      %v1585 = vpop.f32.mrb[0].mxu0
      %1586 = vmatprep.mubr.bf16.mxu0 0
      %1587 = vmatmul.mubr.bf16.gmra.mrb[0].mxu0 %v1281
      %v1588 = vpop.f32.mrb[0].mxu0
      %v1589 = vadd.f32 %v1456, %v1588
      %v1590 = vpop.f32.mrb[0].mxu0
      %v1591 = vpop.f32.mrb[0].mxu0
      %v1592 = vadd.f32 %v1456, %v1591
      %v1593 = vpop.f32.mrb[0].mxu0
      %1594 = vmatprep.mubr.bf16.mxu0 0
      %1595 = vmatmul.mubr.bf16.gmra.mrb[0].mxu0 %v1282
      %v1596 = vpop.f32.mrb[0].mxu0
      %v1597 = vadd.f32 %v1456, %v1596
      %v1598 = vpop.f32.mrb[0].mxu0
      %v1599 = vpop.f32.mrb[0].mxu0
      %v1600 = vadd.f32 %v1456, %v1599
      %v1601 = vpop.f32.mrb[0].mxu0
      %1602 = vmatprep.mubr.bf16.mxu0 0
      %1603 = vmatmul.mubr.bf16.gmra.mrb[0].mxu0 %v1283
      %v1604 = vpop.f32.mrb[0].mxu0
      %v1605 = vadd.f32 %v1456, %v1604
      %v1606 = vpop.f32.mrb[0].mxu0
      %v1607 = vpop.f32.mrb[0].mxu0
      %v1608 = vadd.f32 %v1456, %v1607
      %v1609 = vpop.f32.mrb[0].mxu0
      %1610 = vmatprep.mubr.bf16.mxu0 0
      %1611 = vmatmul.mubr.bf16.gmra.mrb[0].mxu0 %v1284
      %v1612 = vpop.f32.mrb[0].mxu0
      %v1613 = vadd.f32 %v1456, %v1612
      %v1614 = vpop.f32.mrb[0].mxu0
      %v1615 = vpop.f32.mrb[0].mxu0
      %v1616 = vadd.f32 %v1456, %v1615
      %v1617 = vpop.f32.mrb[0].mxu0
      %1618 = vmatprep.mubr.bf16.mxu0 0
      %1619 = vmatmul.mubr.bf16.gmra.mrb[0].mxu0 %v1285
      %v1620 = vpop.f32.mrb[0].mxu0
      %v1621 = vadd.f32 %v1456, %v1620
      %v1622 = vpop.f32.mrb[0].mxu0
      %v1623 = vpop.f32.mrb[0].mxu0
      %v1624 = vadd.f32 %v1456, %v1623
      %v1625 = vpop.f32.mrb[0].mxu0
      %1626 = vmatprep.mubr.bf16.mxu0 0
      %1627 = vmatmul.mubr.bf16.gmra.mrb[0].mxu0 %v1286
      %v1628 = vpop.f32.mrb[0].mxu0
      %v1629 = vadd.f32 %v1456, %v1628
      %v1630 = vpop.f32.mrb[0].mxu0
      %v1631 = vpop.f32.mrb[0].mxu0
      %v1632 = vadd.f32 %v1456, %v1631
      %v1633 = vpop.f32.mrb[0].mxu0
      %1634 = vmatprep.mubr.bf16.mxu0 0
      %1635 = vmatmul.mubr.bf16.gmra.mrb[0].mxu0 %v1287
      %v1636 = vpop.f32.mrb[0].mxu0
      %v1637 = vadd.f32 %v1456, %v1636
      %v1638 = vpop.f32.mrb[0].mxu0
      %v1639 = vpop.f32.mrb[0].mxu0
      %v1640 = vadd.f32 %v1456, %v1639
      %v1641 = vpop.f32.mrb[0].mxu0
      %1642 = vmatprep.mubr.bf16.mxu0 0
      %1643 = vmatmul.mubr.bf16.gmra.mrb[0].mxu0 %v1288
      %v1644 = vpop.f32.mrb[0].mxu0
      %v1645 = vadd.f32 %v1456, %v1644
      %v1646 = vpop.f32.mrb[0].mxu0
      %v1647 = vpop.f32.mrb[0].mxu0
      %v1648 = vadd.f32 %v1456, %v1647
      %v1649 = vpop.f32.mrb[0].mxu0
      %1650 = vmatprep.mubr.bf16.mxu0 0
      %1651 = vmatmul.mubr.bf16.gmra.mrb[0].mxu0 %v1289
      %v1652 = vpop.f32.mrb[0].mxu0
      %v1653 = vadd.f32 %v1456, %v1652
      %v1654 = vpop.f32.mrb[0].mxu0
      %v1655 = vpop.f32.mrb[0].mxu0
      %v1656 = vadd.f32 %v1456, %v1655
      %v1657 = vpop.f32.mrb[0].mxu0
      %1658 = vmatprep.mubr.bf16.mxu0 0
      %1659 = vmatmul.mubr.bf16.gmra.mrb[0].mxu0 %v1290
      %v1660 = vpop.f32.mrb[0].mxu0
      %v1661 = vadd.f32 %v1456, %v1660
      %v1662 = vpop.f32.mrb[0].mxu0
      %v1663 = vpop.f32.mrb[0].mxu0
      %v1664 = vadd.f32 %v1456, %v1663
      %v1665 = vpop.f32.mrb[0].mxu0
      %1666 = vdwg.mxu0
      %v1667 = vtanh.pop %v1541
      %v1668 = vtanh.pop %v1544
      %v1669 = vtanh.pop %v1549
      %v1670 = vtanh.pop %v1552
      %v1671 = vtanh.pop %v1557
      %v1672 = vtanh.pop %v1560
      %v1673 = vtanh.pop %v1565
      %v1674 = vtanh.pop %v1568
      %v1675 = vtanh.pop %v1573
      %v1676 = vtanh.pop %v1576
      %v1677 = vtanh.pop %v1581
      %v1678 = vtanh.pop %v1584
      %v1679 = vtanh.pop %v1589
      %v1680 = vtanh.pop %v1592
      %v1681 = vtanh.pop %v1597
      %v1682 = vtanh.pop %v1600
      %v1683 = vtanh.pop %v1605
      %v1684 = vtanh.pop %v1608
      %v1685 = vtanh.pop %v1613
      %v1686 = vtanh.pop %v1616
      %v1687 = vtanh.pop %v1621
      %v1688 = vtanh.pop %v1624
      %v1689 = vtanh.pop %v1629
      %v1690 = vtanh.pop %v1632
      %v1691 = vtanh.pop %v1637
      %v1692 = vtanh.pop %v1640
      %v1693 = vtanh.pop %v1645
      %v1694 = vtanh.pop %v1648
      %v1695 = vtanh.pop %v1653
      %v1696 = vtanh.pop %v1656
      %v1697 = vtanh.pop %v1661
      %v1698 = vtanh.pop %v1664
      %v1699 = vld [vmem:[%s404] sm:$0x1]
      %v1700 = vadd.f32 %v1667, %v1668
      %v1701 = vadd.f32 %v1700, %v1669
      %v1702 = vadd.f32 %v1701, %v1670
      %v1703 = vadd.f32 %v1702, %v1671
      %v1704 = vadd.f32 %v1703, %v1672
      %v1705 = vadd.f32 %v1704, %v1673
      %v1706 = vadd.f32 %v1705, %v1674
      %v1707 = vadd.f32 %v1706, %v1675
      %v1708 = vadd.f32 %v1707, %v1676
      %v1709 = vadd.f32 %v1708, %v1677
      %v1710 = vadd.f32 %v1709, %v1678
      %v1711 = vadd.f32 %v1710, %v1679
      %v1712 = vadd.f32 %v1711, %v1680
      %v1713 = vadd.f32 %v1712, %v1681
      %v1714 = vadd.f32 %v1713, %v1682
      %v1715 = vadd.f32 %v1714, %v1683
      %v1716 = vadd.f32 %v1715, %v1684
      %v1717 = vadd.f32 %v1716, %v1685
      %v1718 = vadd.f32 %v1717, %v1686
      %v1719 = vadd.f32 %v1718, %v1687
      %v1720 = vadd.f32 %v1719, %v1688
      %v1721 = vadd.f32 %v1720, %v1689
      %v1722 = vadd.f32 %v1721, %v1690
      %v1723 = vadd.f32 %v1722, %v1691
      %v1724 = vadd.f32 %v1723, %v1692
      %v1725 = vadd.f32 %v1724, %v1693
      %v1726 = vadd.f32 %v1725, %v1694
      %v1727 = vadd.f32 %v1726, %v1695
      %v1728 = vadd.f32 %v1727, %v1696
      %v1729 = vadd.f32 %v1728, %v1697
      %v1730 = vadd.f32 %v1729, %v1698
      %v1731 = vrot.slane %v1730, 4
      %v1732 = vadd.f32 %v1730, %v1731
      %v1733 = vrot.slane %v1732, 2
      %v1734 = vadd.f32 %v1732, %v1733
      %v1735 = vrot.slane %v1734, 1
      %v1736 = vadd.f32 %v1734, %v1735
      %v1737 = vadd.f32 %v1699, %v1736
      %1738 = vst [vmem:[%s404] sm:$0x1] %v1737
      %s1739 = smul.u32 32, %s25
      %p1740 = scmp.lt.s32.totalorder %s24, 2
      %s1741 = scalar_select %p1740, %s24, 2
      %p1742 = scmp.lt.s32.totalorder %s1739, 31
      %s1743 = scalar_select %p1742, %s1739, 31
      %s1744 = smul.addr %s1741, 32
      %s1745 = sadd.s32 %s1743, %s1744
      %s1746 = smul.addr %s1745, 4
      %s1747 = scalar_lea.vmem %s7, %s1746
      %p1748 = scmp.lt.s32.totalorder %s24, 2
      %s1749 = scalar_select %p1748, %s24, 2
      %s1750 = scalar_lea.vmem %s8, %s1749
      // Predicated region
      $region53: #{mp_encoder_forward.4} parent=47 // pred_check
        %p1751 = pneg %p221
      $region54: #{mp_encoder_forward.4} parent=47 // pred_check_branch
        %1753 = sbr.rel (%p1751) target = $region56
      $region55: #{mp_encoder_forward.4} parent=47 // pred_region
        %s1754 = smul.u32 32, %s25
      $region56: #{mp_encoder_forward.4} parent=47 // pred_fallthru
        _
      // Predicated region
      $region57: #{mp_encoder_forward.4} parent=47 // pred_check
        %p1755 = pneg %p247
      $region58: #{mp_encoder_forward.4} parent=47 // pred_check_branch
        %1757 = sbr.rel (%p1755) target = $region60
      $region59: #{mp_encoder_forward.4} parent=47 // pred_region
        _
      $region60: #{mp_encoder_forward.4} parent=47 // pred_fallthru
        _
    $region48: #{mp_encoder_forward.4} parent=5 // pred_fallthru
      _
    %p1758 = scmp.le.s32.totalorder 2, %s15
    // Predicated region
    $region61: #{mp_encoder_forward.4} parent=5 // pred_check
      %p1759 = pneg %p1758
    $region62: #{mp_encoder_forward.4} parent=5 // pred_check_branch
      %1761 = sbr.rel (%p1759) target = $region64
    $region63: #{mp_encoder_forward.4} parent=5 // pred_region
      %s1762 = ssub.s32 %s15, 2
      // Predicated region
      $region65: #{mp_encoder_forward.4} parent=63 // pred_check
        %p1763 = pneg %p227
      $region66: #{mp_encoder_forward.4} parent=63 // pred_check_branch
        %1765 = sbr.rel (%p1763) target = $region68
      $region67: #{mp_encoder_forward.4} parent=63 // pred_region
        %s1766 = smul.u32 32, %s27
        %p1767 = scmp.lt.s32.totalorder %s26, 2
        %s1768 = scalar_select %p1767, %s26, 2
        %p1769 = scmp.lt.s32.totalorder %s1766, 31
        %s1770 = scalar_select %p1769, %s1766, 31
        %s1771 = smul.addr %s1768, 32
        %s1772 = sadd.s32 %s1770, %s1771
        %s1773 = smul.addr %s1772, 4
        %s1774 = scalar_lea.vmem %s7, %s1773
      $region68: #{mp_encoder_forward.4} parent=63 // pred_fallthru
        _
      // Predicated region
      $region69: #{mp_encoder_forward.4} parent=63 // pred_check
        %p1775 = pneg %p253
      $region70: #{mp_encoder_forward.4} parent=63 // pred_check_branch
        %1777 = sbr.rel (%p1775) target = $region72
      $region71: #{mp_encoder_forward.4} parent=63 // pred_region
        %p1778 = scmp.lt.s32.totalorder %s26, 2
        %s1779 = scalar_select %p1778, %s26, 2
        %s1780 = scalar_lea.vmem %s8, %s1779
      $region72: #{mp_encoder_forward.4} parent=63 // pred_fallthru
        _
    $region64: #{mp_encoder_forward.4} parent=5 // pred_fallthru
      _
  $region6: #{mp_encoder_forward.4} parent=0 // loop_footer
    %s19 = sadd.s32 1, %s15
  $region7: #{mp_encoder_forward.4} parent=0 // loop_footer_branch
    %14 = sbr.rel target = $region3
  $region8: #{mp_encoder_forward.4} parent=0 // loop_exit
    _

</llo_original>
